<compile_context>
chip_gen: v6e
topology: v6e:2x2x1
jax: 0.10.0
libtpu: 0.0.40
codegen_flags: <defaults>
</compile_context>

<pallas_src>
import functools

import jax
import jax.numpy as jnp
from jax.experimental import pallas as pl
from jax.experimental.pallas import tpu as pltpu

LANE = 128


def _round_up(x, m):
    return (x + m - 1) // m * m


# ------------------------------ fused kernel --------------------------------

def decoder_step_kernel(tok_ref,      # SMEM  [B] int32 token ids
                        emb_ref,      # VMEM  [V, Xc] f32 (lane-padded table)
                        w_ref,        # VMEM  [L, Xc+Gp, 4*Gp] weight dtype
                        b_ref,        # VMEM  [L, 1, 4*Gp] f32 (b_ih + b_hh)
                        h_in_ref,     # VMEM  [L, B, Gp] f32
                        c_in_ref,     # VMEM  [L, B, Gp] f32
                        fcw_ref,      # VMEM  [Gp, Op] weight dtype
                        fcb_ref,      # VMEM  [1, Op] f32
                        pred_ref,     # VMEM out [B, Op] f32
                        h_out_ref,    # VMEM out [L, B, Gp] f32 (aliased)
                        c_out_ref,    # VMEM out [L, B, Gp] f32 (aliased)
                        xh_ref):      # VMEM scratch [B, Xc+Gp] weight dtype
    L, B, Gp = h_in_ref.shape
    Xc = xh_ref.shape[1] - Gp
    wdt = w_ref.dtype

    # ---- embedding gather: dynamic-slice loads from the VMEM-resident table
    # (dropout == identity in eval mode).  One cast + one block store.
    rows = [emb_ref[pl.ds(tok_ref[b], 1), :] for b in range(B)]  # B x [1, Xc]
    x = jnp.concatenate(rows, axis=0)                            # [B, Xc] f32
    xh_ref[:, 0:Xc] = x.astype(wdt)

    h_new = None

    # ---- LSTM layers, statically unrolled for full LLO visibility ----
    for l in range(L):
        c = c_in_ref[l]                                          # [B, Gp] f32
        # write the h half of [x | h] (cast once, only Gp lanes touched)
        xh_ref[:, Xc:Xc + Gp] = h_in_ref[l].astype(wdt)
        # Single merged gate matmul: [x | h] @ [[W_ih^T]; [W_hh^T]], K = Xc+Gp.
        gates = jnp.dot(xh_ref[...], w_ref[l],
                        preferred_element_type=jnp.float32) + b_ref[l]
        # PyTorch gate order i, f, g, o.  Each gate occupies its own
        # 128-lane-aligned block of width Gp (real lanes [0, H)).
        i_g = jax.nn.sigmoid(gates[:, 0 * Gp:1 * Gp])
        f_g = jax.nn.sigmoid(gates[:, 1 * Gp:2 * Gp])
        g_g = jnp.tanh(      gates[:, 2 * Gp:3 * Gp])
        o_g = jax.nn.sigmoid(gates[:, 3 * Gp:4 * Gp])
        c_new = f_g * c + i_g * g_g          # padded lanes: 0.5*0 + 0.5*0 = 0
        h_new = o_g * jnp.tanh(c_new)        # padded lanes stay exactly 0
        h_out_ref[l] = h_new
        c_out_ref[l] = c_new
        # inter-layer dropout is identity in eval mode
        if l + 1 < L:
            # next layer's x = h_new; lanes [Gp, Xc) keep stale layer-0 data,
            # but those weight rows are zero for layers > 0, so it is inert.
            xh_ref[:, 0:Gp] = h_new.astype(wdt)

    # ---- fc_out on the top layer's hidden state ----
    pred_ref[...] = (jnp.dot(h_new.astype(wdt), fcw_ref[...],
                             preferred_element_type=jnp.float32)
                     + fcb_ref[...])


# --------------------------- parameter packing -------------------------------

def init_raw_params(key, output_dim, emb_dim, hid_dim, n_layers):
    """PyTorch-layout parameters (what nn.Embedding / nn.LSTM / nn.Linear hold)."""
    keys = iter(jax.random.split(key, 3 + 4 * n_layers))
    raw = {
        "embedding": jax.random.normal(next(keys), (output_dim, emb_dim),
                                       jnp.float32) * 0.1,
        "w_ih": [], "w_hh": [], "b_ih": [], "b_hh": [],
    }
    for l in range(n_layers):
        din = emb_dim if l == 0 else hid_dim
        raw["w_ih"].append(jax.random.normal(next(keys), (4 * hid_dim, din),
                                             jnp.float32) * 0.1)
        raw["w_hh"].append(jax.random.normal(next(keys), (4 * hid_dim, hid_dim),
                                             jnp.float32) * 0.1)
        raw["b_ih"].append(jax.random.normal(next(keys), (4 * hid_dim,),
                                             jnp.float32) * 0.1)
        raw["b_hh"].append(jax.random.normal(next(keys), (4 * hid_dim,),
                                             jnp.float32) * 0.1)
    raw["fc_w"] = jax.random.normal(next(keys), (output_dim, hid_dim),
                                    jnp.float32) * 0.1
    raw["fc_b"] = jax.random.normal(next(keys), (output_dim,),
                                    jnp.float32) * 0.1
    return raw


def pack_decoder_params(raw, weight_dtype=jnp.bfloat16):
    """Fuse + lane-pad PyTorch-layout params into kernel operands.

    Each gate k of layer l occupies its own 128-lane block [k*Gp, k*Gp+H) of a
    single combined weight [[W_ih^T]; [W_hh^T]] of shape [Xc+Gp, 4*Gp]; padded
    rows/columns are zero so padded lanes of the state stay exactly zero.
    """
    emb = raw["embedding"]                     # [V, E]
    V, E = emb.shape
    H = raw["w_hh"][0].shape[1]
    L = len(raw["w_ih"])
    O = raw["fc_w"].shape[0]

    Gp = _round_up(H, LANE)
    Xc = max(_round_up(E, LANE), Gp)           # running-input lane width
    Op = _round_up(O, LANE)

    emb_pad = jnp.zeros((V, Xc), jnp.float32).at[:, :E].set(emb)

    w_layers, b_layers = [], []
    for l in range(L):
        w_ih = raw["w_ih"][l]                  # [4H, Din]
        w_hh = raw["w_hh"][l]                  # [4H, H]
        bias = raw["b_ih"][l] + raw["b_hh"][l]  # [4H]
        din = w_ih.shape[1]
        w_comb = jnp.zeros((Xc + Gp, 4 * Gp), jnp.float32)
        b_comb = jnp.zeros((1, 4 * Gp), jnp.float32)
        for k in range(4):                     # PyTorch gate order i, f, g, o
            w_comb = w_comb.at[:din, k * Gp:k * Gp + H].set(
                w_ih[k * H:(k + 1) * H, :].T)
            w_comb = w_comb.at[Xc:Xc + H, k * Gp:k * Gp + H].set(
                w_hh[k * H:(k + 1) * H, :].T)
            b_comb = b_comb.at[0, k * Gp:k * Gp + H].set(
                bias[k * H:(k + 1) * H])
        w_layers.append(w_comb)
        b_layers.append(b_comb)

    fc_w_pad = jnp.zeros((Gp, Op), jnp.float32).at[:H, :O].set(raw["fc_w"].T)
    fc_b_pad = jnp.zeros((1, Op), jnp.float32).at[:, :O].set(raw["fc_b"])

    return {
        "embedding": emb_pad,                                   # f32 table
        "w_stack": jnp.stack(w_layers).astype(weight_dtype),    # [L, Xc+Gp, 4Gp]
        "b_stack": jnp.stack(b_layers),                         # [L, 1, 4Gp] f32
        "fc_w": fc_w_pad.astype(weight_dtype),                  # [Gp, Op]
        "fc_b": fc_b_pad,                                       # [1, Op] f32
    }


# ------------------------------ forward wrapper ------------------------------

@functools.partial(jax.jit, static_argnames=("output_dim",))
def decoder_forward(packed, tokens, hidden, cell, *, output_dim):
    """tokens: [B] int32, hidden/cell: [L, B, H] f32.
       Returns (prediction [B, output_dim], hidden, cell) -- PyTorch semantics."""
    L, B, H = hidden.shape
    w_stack = packed["w_stack"]
    Gp = w_stack.shape[2] // 4
    Xc = w_stack.shape[1] - Gp
    Op = packed["fc_w"].shape[1]
    V = packed["embedding"].shape[0]

    # guard against OOB token ids (dynamic-slice gather has no runtime check)
    tokens = jnp.clip(tokens.astype(jnp.int32), 0, V - 1)

    hidden_pad = jnp.zeros((L, B, Gp), jnp.float32).at[:, :, :H].set(hidden)
    cell_pad = jnp.zeros((L, B, Gp), jnp.float32).at[:, :, :H].set(cell)

    pred_pad, h_pad, c_pad = pl.pallas_call(
        decoder_step_kernel,
        out_shape=(
            jax.ShapeDtypeStruct((B, Op), jnp.float32),
            jax.ShapeDtypeStruct((L, B, Gp), jnp.float32),
            jax.ShapeDtypeStruct((L, B, Gp), jnp.float32),
        ),
        in_specs=[
            pl.BlockSpec(memory_space=pltpu.MemorySpace.SMEM),   # tokens
            pl.BlockSpec(memory_space=pltpu.MemorySpace.VMEM),   # embedding
            pl.BlockSpec(memory_space=pltpu.MemorySpace.VMEM),   # w_stack
            pl.BlockSpec(memory_space=pltpu.MemorySpace.VMEM),   # b_stack
            pl.BlockSpec(memory_space=pltpu.MemorySpace.VMEM),   # hidden
            pl.BlockSpec(memory_space=pltpu.MemorySpace.VMEM),   # cell
            pl.BlockSpec(memory_space=pltpu.MemorySpace.VMEM),   # fc_w
            pl.BlockSpec(memory_space=pltpu.MemorySpace.VMEM),   # fc_b
        ],
        out_specs=(
            pl.BlockSpec(memory_space=pltpu.MemorySpace.VMEM),
            pl.BlockSpec(memory_space=pltpu.MemorySpace.VMEM),
            pl.BlockSpec(memory_space=pltpu.MemorySpace.VMEM),
        ),
        scratch_shapes=[
            pltpu.VMEM((B, Xc + Gp), w_stack.dtype),   # persistent [x | h]
        ],
        # recurrent state updated in place (hidden_pad->h_out, cell_pad->c_out)
        input_output_aliases={4: 1, 5: 2},
    )(tokens, packed["embedding"], w_stack, packed["b_stack"],
      hidden_pad, cell_pad, packed["fc_w"], packed["fc_b"])

    prediction = pred_pad[:, :output_dim]
    return prediction, h_pad[:, :, :H], c_pad[:, :, :H]


# ----------------------------- pure-JAX reference ----------------------------

def decoder_reference(raw, tokens, hidden, cell, weight_dtype):
    """Mirrors the kernel's precision: matmul inputs in weight_dtype, f32
    accumulation, all element-wise gate math in f32."""
    def mm(a, w):
        return jnp.dot(a.astype(weight_dtype), w.astype(weight_dtype),
                       preferred_element_type=jnp.float32)

    H = hidden.shape[2]
    x = jnp.take(raw["embedding"], tokens, axis=0)
    new_h, new_c = [], []
    for l in range(hidden.shape[0]):
        gates = (mm(x, raw["w_ih"][l].T) + mm(hidden[l], raw["w_hh"][l].T)
                 + raw["b_ih"][l] + raw["b_hh"][l])
        i = jax.nn.sigmoid(gates[:, 0 * H:1 * H])
        f = jax.nn.sigmoid(gates[:, 1 * H:2 * H])
        g = jnp.tanh(gates[:, 2 * H:3 * H])
        o = jax.nn.sigmoid(gates[:, 3 * H:4 * H])
        c_l = f * cell[l] + i * g
        h_l = o * jnp.tanh(c_l)
        new_h.append(h_l)
        new_c.append(c_l)
        x = h_l
    pred = mm(x, raw["fc_w"].T) + raw["fc_b"]
    return pred, jnp.stack(new_h, 0), jnp.stack(new_c, 0)


# ------------------------------------ main -----------------------------------

if __name__ == "__main__":
    OUTPUT_DIM = 64   # vocab size
    EMB_DIM = 32
    HID_DIM = 32
    N_LAYERS = 2
    BATCH = 8
    # bf16 weights per v6e/v7x guidance (MXU-native, halves weight bytes);
    # element-wise gate math stays f32 (v5e-safe).  Set to jnp.float32 for
    # exact f32 behaviour.
    WEIGHT_DTYPE = jnp.bfloat16

    key = jax.random.PRNGKey(0)
    k_param, k_tok, k_h, k_c = jax.random.split(key, 4)

    raw = init_raw_params(k_param, OUTPUT_DIM, EMB_DIM, HID_DIM, N_LAYERS)
    packed = pack_decoder_params(raw, WEIGHT_DTYPE)

    tokens = jax.random.randint(k_tok, (BATCH,), 0, OUTPUT_DIM, jnp.int32)
    hidden = jax.random.normal(k_h, (N_LAYERS, BATCH, HID_DIM), jnp.float32)
    cell = jax.random.normal(k_c, (N_LAYERS, BATCH, HID_DIM), jnp.float32)

    pred, h_new, c_new = decoder_forward(packed, tokens, hidden, cell,
                                         output_dim=OUTPUT_DIM)
    jax.block_until_ready((pred, h_new, c_new))

    # sanity check vs pure-JAX reference (same precision policy)
    pred_r, h_r, c_r = decoder_reference(raw, tokens, hidden, cell, WEIGHT_DTYPE)
    assert jnp.allclose(pred, pred_r, atol=2e-3, rtol=2e-3), \
        float(jnp.max(jnp.abs(pred - pred_r)))
    assert jnp.allclose(h_new, h_r, atol=2e-3, rtol=2e-3), \
        float(jnp.max(jnp.abs(h_new - h_r)))
    assert jnp.allclose(c_new, c_r, atol=2e-3, rtol=2e-3), \
        float(jnp.max(jnp.abs(c_new - c_r)))

    print("KERNEL_OK")
</pallas_src>

<mosaic_0001>
module attributes {stable_mosaic.version = 11 : i64} {
  func.func @decoder_step_kernel(%arg0: memref<8xi32, #tpu.memory_space<smem>>, %arg1: memref<64x128xf32, #tpu.memory_space<vmem>>, %arg2: memref<2x256x512xbf16, #tpu.memory_space<vmem>>, %arg3: memref<2x1x512xf32, #tpu.memory_space<vmem>>, %arg4: memref<2x8x128xf32, #tpu.memory_space<vmem>>, %arg5: memref<2x8x128xf32, #tpu.memory_space<vmem>>, %arg6: memref<128x128xbf16, #tpu.memory_space<vmem>>, %arg7: memref<1x128xf32, #tpu.memory_space<vmem>>, %arg8: memref<8x128xf32, #tpu.memory_space<vmem>>, %arg9: memref<2x8x128xf32, #tpu.memory_space<vmem>>, %arg10: memref<2x8x128xf32, #tpu.memory_space<vmem>>, %arg11: memref<8x256xbf16, #tpu.memory_space<vmem>>) attributes {dimension_semantics = [], scalar_prefetch = 0 : i64, scratch_operands = 1 : i64, tpu.core_type = #tpu.core_type<tc>} {
    %c0 = arith.constant 0 : index
    %0 = memref.load %arg0[%c0] : memref<8xi32, #tpu.memory_space<smem>>
    %1 = arith.index_cast %0 : i32 to index
    %c0_0 = arith.constant 0 : index
    %2 = vector.load %arg1[%1, %c0_0] : memref<64x128xf32, #tpu.memory_space<vmem>>, vector<1x128xf32>
    %c1 = arith.constant 1 : index
    %3 = memref.load %arg0[%c1] : memref<8xi32, #tpu.memory_space<smem>>
    %4 = arith.index_cast %3 : i32 to index
    %c0_1 = arith.constant 0 : index
    %5 = vector.load %arg1[%4, %c0_1] : memref<64x128xf32, #tpu.memory_space<vmem>>, vector<1x128xf32>
    %c2 = arith.constant 2 : index
    %6 = memref.load %arg0[%c2] : memref<8xi32, #tpu.memory_space<smem>>
    %7 = arith.index_cast %6 : i32 to index
    %c0_2 = arith.constant 0 : index
    %8 = vector.load %arg1[%7, %c0_2] : memref<64x128xf32, #tpu.memory_space<vmem>>, vector<1x128xf32>
    %c3 = arith.constant 3 : index
    %9 = memref.load %arg0[%c3] : memref<8xi32, #tpu.memory_space<smem>>
    %10 = arith.index_cast %9 : i32 to index
    %c0_3 = arith.constant 0 : index
    %11 = vector.load %arg1[%10, %c0_3] : memref<64x128xf32, #tpu.memory_space<vmem>>, vector<1x128xf32>
    %c4 = arith.constant 4 : index
    %12 = memref.load %arg0[%c4] : memref<8xi32, #tpu.memory_space<smem>>
    %13 = arith.index_cast %12 : i32 to index
    %c0_4 = arith.constant 0 : index
    %14 = vector.load %arg1[%13, %c0_4] : memref<64x128xf32, #tpu.memory_space<vmem>>, vector<1x128xf32>
    %c5 = arith.constant 5 : index
    %15 = memref.load %arg0[%c5] : memref<8xi32, #tpu.memory_space<smem>>
    %16 = arith.index_cast %15 : i32 to index
    %c0_5 = arith.constant 0 : index
    %17 = vector.load %arg1[%16, %c0_5] : memref<64x128xf32, #tpu.memory_space<vmem>>, vector<1x128xf32>
    %c6 = arith.constant 6 : index
    %18 = memref.load %arg0[%c6] : memref<8xi32, #tpu.memory_space<smem>>
    %19 = arith.index_cast %18 : i32 to index
    %c0_6 = arith.constant 0 : index
    %20 = vector.load %arg1[%19, %c0_6] : memref<64x128xf32, #tpu.memory_space<vmem>>, vector<1x128xf32>
    %c7 = arith.constant 7 : index
    %21 = memref.load %arg0[%c7] : memref<8xi32, #tpu.memory_space<smem>>
    %22 = arith.index_cast %21 : i32 to index
    %c0_7 = arith.constant 0 : index
    %23 = vector.load %arg1[%22, %c0_7] : memref<64x128xf32, #tpu.memory_space<vmem>>, vector<1x128xf32>
    %24 = tpu.concatenate %2, %5, %8, %11, %14, %17, %20, %23 in 0 : vector<1x128xf32>, vector<1x128xf32>, vector<1x128xf32>, vector<1x128xf32>, vector<1x128xf32>, vector<1x128xf32>, vector<1x128xf32>, vector<1x128xf32> -> vector<8x128xf32>
    %25 = arith.truncf %24 : vector<8x128xf32> to vector<8x128xbf16>
    %c0_8 = arith.constant 0 : index
    %c0_9 = arith.constant 0 : index
    %26 = vector.load %arg11[%c0_8, %c0_9] : memref<8x256xbf16, #tpu.memory_space<vmem>>, vector<8x128xbf16>
    tpu.vector_store %arg11[%c0_8, %c0_9], %25 {strides = array<i32>} : memref<8x256xbf16, #tpu.memory_space<vmem>>, vector<8x128xbf16>,
    %c0_10 = arith.constant 0 : index
    %c0_11 = arith.constant 0 : index
    %c0_12 = arith.constant 0 : index
    %27 = vector.load %arg5[%c0_10, %c0_11, %c0_12] : memref<2x8x128xf32, #tpu.memory_space<vmem>>, vector<1x8x128xf32>
    %28 = vector.shape_cast %27 : vector<1x8x128xf32> to vector<8x128xf32>
    %c0_13 = arith.constant 0 : index
    %c0_14 = arith.constant 0 : index
    %c0_15 = arith.constant 0 : index
    %29 = vector.load %arg4[%c0_13, %c0_14, %c0_15] : memref<2x8x128xf32, #tpu.memory_space<vmem>>, vector<1x8x128xf32>
    %30 = vector.shape_cast %29 : vector<1x8x128xf32> to vector<8x128xf32>
    %31 = arith.truncf %30 : vector<8x128xf32> to vector<8x128xbf16>
    %c0_16 = arith.constant 0 : index
    %c128 = arith.constant 128 : index
    %32 = vector.load %arg11[%c0_16, %c128] : memref<8x256xbf16, #tpu.memory_space<vmem>>, vector<8x128xbf16>
    tpu.vector_store %arg11[%c0_16, %c128], %31 {strides = array<i32>} : memref<8x256xbf16, #tpu.memory_space<vmem>>, vector<8x128xbf16>,
    %c0_17 = arith.constant 0 : index
    %c0_18 = arith.constant 0 : index
    %33 = vector.load %arg11[%c0_17, %c0_18] : memref<8x256xbf16, #tpu.memory_space<vmem>>, vector<8x256xbf16>
    %c0_19 = arith.constant 0 : index
    %c0_20 = arith.constant 0 : index
    %c0_21 = arith.constant 0 : index
    %34 = vector.load %arg2[%c0_19, %c0_20, %c0_21] : memref<2x256x512xbf16, #tpu.memory_space<vmem>>, vector<1x256x512xbf16>
    %35 = vector.shape_cast %34 : vector<1x256x512xbf16> to vector<256x512xbf16>
    %cst = arith.constant dense<0.000000e+00> : vector<8x512xf32>
    %36 = tpu.matmul %33, %35, %cst {dimension_numbers = #tpu.dot_dimension_numbers<[1], [0], [0], [1], [0, 0, 1, 1], [], []>} : vector<8x256xbf16>, vector<256x512xbf16>, vector<8x512xf32> -> vector<8x512xf32>
    %c0_22 = arith.constant 0 : index
    %c0_23 = arith.constant 0 : index
    %c0_24 = arith.constant 0 : index
    %37 = vector.load %arg3[%c0_22, %c0_23, %c0_24] : memref<2x1x512xf32, #tpu.memory_space<vmem>>, vector<1x1x512xf32>
    %38 = vector.shape_cast %37 : vector<1x1x512xf32> to vector<1x512xf32>
    %39 = vector.broadcast %38 : vector<1x512xf32> to vector<8x512xf32>
    %40 = arith.addf %36, %39 : vector<8x512xf32>
    %41 = vector.extract_strided_slice %40 {offsets = [0, 0], sizes = [8, 128], strides = [1, 1]} : vector<8x512xf32> to vector<8x128xf32>
    %42 = arith.negf %41 : vector<8x128xf32>
    %43 = math.exp %42 : vector<8x128xf32>
    %cst_25 = arith.constant 1.000000e+00 : f32
    %44 = vector.broadcast %cst_25 : f32 to vector<8x128xf32>
    %45 = arith.addf %44, %43 : vector<8x128xf32>
    %46 = arith.divf %44, %45 : vector<8x128xf32>
    %47 = vector.extract_strided_slice %40 {offsets = [0, 128], sizes = [8, 128], strides = [1, 1]} : vector<8x512xf32> to vector<8x128xf32>
    %48 = arith.negf %47 : vector<8x128xf32>
    %49 = math.exp %48 : vector<8x128xf32>
    %cst_26 = arith.constant 1.000000e+00 : f32
    %50 = vector.broadcast %cst_26 : f32 to vector<8x128xf32>
    %51 = arith.addf %50, %49 : vector<8x128xf32>
    %52 = arith.divf %50, %51 : vector<8x128xf32>
    %53 = vector.extract_strided_slice %40 {offsets = [0, 256], sizes = [8, 128], strides = [1, 1]} : vector<8x512xf32> to vector<8x128xf32>
    %54 = math.tanh %53 : vector<8x128xf32>
    %55 = vector.extract_strided_slice %40 {offsets = [0, 384], sizes = [8, 128], strides = [1, 1]} : vector<8x512xf32> to vector<8x128xf32>
    %56 = arith.negf %55 : vector<8x128xf32>
    %57 = math.exp %56 : vector<8x128xf32>
    %cst_27 = arith.constant 1.000000e+00 : f32
    %58 = vector.broadcast %cst_27 : f32 to vector<8x128xf32>
    %59 = arith.addf %58, %57 : vector<8x128xf32>
    %60 = arith.divf %58, %59 : vector<8x128xf32>
    %61 = arith.mulf %52, %28 : vector<8x128xf32>
    %62 = arith.mulf %46, %54 : vector<8x128xf32>
    %63 = arith.addf %61, %62 : vector<8x128xf32>
    %64 = math.tanh %63 : vector<8x128xf32>
    %65 = arith.mulf %60, %64 : vector<8x128xf32>
    %c0_28 = arith.constant 0 : index
    %c0_29 = arith.constant 0 : index
    %c0_30 = arith.constant 0 : index
    %66 = vector.load %arg9[%c0_28, %c0_29, %c0_30] : memref<2x8x128xf32, #tpu.memory_space<vmem>>, vector<1x8x128xf32>
    %67 = vector.shape_cast %66 : vector<1x8x128xf32> to vector<8x128xf32>
    %68 = vector.shape_cast %65 : vector<8x128xf32> to vector<1x8x128xf32>
    tpu.vector_store %arg9[%c0_28, %c0_29, %c0_30], %68 {strides = array<i32>} : memref<2x8x128xf32, #tpu.memory_space<vmem>>, vector<1x8x128xf32>,
    %c0_31 = arith.constant 0 : index
    %c0_32 = arith.constant 0 : index
    %c0_33 = arith.constant 0 : index
    %69 = vector.load %arg10[%c0_31, %c0_32, %c0_33] : memref<2x8x128xf32, #tpu.memory_space<vmem>>, vector<1x8x128xf32>
    %70 = vector.shape_cast %69 : vector<1x8x128xf32> to vector<8x128xf32>
    %71 = vector.shape_cast %63 : vector<8x128xf32> to vector<1x8x128xf32>
    tpu.vector_store %arg10[%c0_31, %c0_32, %c0_33], %71 {strides = array<i32>} : memref<2x8x128xf32, #tpu.memory_space<vmem>>, vector<1x8x128xf32>,
    %72 = arith.truncf %65 : vector<8x128xf32> to vector<8x128xbf16>
    %c0_34 = arith.constant 0 : index
    %c0_35 = arith.constant 0 : index
    %73 = vector.load %arg11[%c0_34, %c0_35] : memref<8x256xbf16, #tpu.memory_space<vmem>>, vector<8x128xbf16>
    tpu.vector_store %arg11[%c0_34, %c0_35], %72 {strides = array<i32>} : memref<8x256xbf16, #tpu.memory_space<vmem>>, vector<8x128xbf16>,
    %c1_36 = arith.constant 1 : index
    %c0_37 = arith.constant 0 : index
    %c0_38 = arith.constant 0 : index
    %74 = vector.load %arg5[%c1_36, %c0_37, %c0_38] : memref<2x8x128xf32, #tpu.memory_space<vmem>>, vector<1x8x128xf32>
    %75 = vector.shape_cast %74 : vector<1x8x128xf32> to vector<8x128xf32>
    %c1_39 = arith.constant 1 : index
    %c0_40 = arith.constant 0 : index
    %c0_41 = arith.constant 0 : index
    %76 = vector.load %arg4[%c1_39, %c0_40, %c0_41] : memref<2x8x128xf32, #tpu.memory_space<vmem>>, vector<1x8x128xf32>
    %77 = vector.shape_cast %76 : vector<1x8x128xf32> to vector<8x128xf32>
    %78 = arith.truncf %77 : vector<8x128xf32> to vector<8x128xbf16>
    %c0_42 = arith.constant 0 : index
    %c128_43 = arith.constant 128 : index
    %79 = vector.load %arg11[%c0_42, %c128_43] : memref<8x256xbf16, #tpu.memory_space<vmem>>, vector<8x128xbf16>
    tpu.vector_store %arg11[%c0_42, %c128_43], %78 {strides = array<i32>} : memref<8x256xbf16, #tpu.memory_space<vmem>>, vector<8x128xbf16>,
    %c0_44 = arith.constant 0 : index
    %c0_45 = arith.constant 0 : index
    %80 = vector.load %arg11[%c0_44, %c0_45] : memref<8x256xbf16, #tpu.memory_space<vmem>>, vector<8x256xbf16>
    %c1_46 = arith.constant 1 : index
    %c0_47 = arith.constant 0 : index
    %c0_48 = arith.constant 0 : index
    %81 = vector.load %arg2[%c1_46, %c0_47, %c0_48] : memref<2x256x512xbf16, #tpu.memory_space<vmem>>, vector<1x256x512xbf16>
    %82 = vector.shape_cast %81 : vector<1x256x512xbf16> to vector<256x512xbf16>
    %cst_49 = arith.constant dense<0.000000e+00> : vector<8x512xf32>
    %83 = tpu.matmul %80, %82, %cst_49 {dimension_numbers = #tpu.dot_dimension_numbers<[1], [0], [0], [1], [0, 0, 1, 1], [], []>} : vector<8x256xbf16>, vector<256x512xbf16>, vector<8x512xf32> -> vector<8x512xf32>
    %c1_50 = arith.constant 1 : index
    %c0_51 = arith.constant 0 : index
    %c0_52 = arith.constant 0 : index
    %84 = vector.load %arg3[%c1_50, %c0_51, %c0_52] : memref<2x1x512xf32, #tpu.memory_space<vmem>>, vector<1x1x512xf32>
    %85 = vector.shape_cast %84 : vector<1x1x512xf32> to vector<1x512xf32>
    %86 = vector.broadcast %85 : vector<1x512xf32> to vector<8x512xf32>
    %87 = arith.addf %83, %86 : vector<8x512xf32>
    %88 = vector.extract_strided_slice %87 {offsets = [0, 0], sizes = [8, 128], strides = [1, 1]} : vector<8x512xf32> to vector<8x128xf32>
    %89 = arith.negf %88 : vector<8x128xf32>
    %90 = math.exp %89 : vector<8x128xf32>
    %cst_53 = arith.constant 1.000000e+00 : f32
    %91 = vector.broadcast %cst_53 : f32 to vector<8x128xf32>
    %92 = arith.addf %91, %90 : vector<8x128xf32>
    %93 = arith.divf %91, %92 : vector<8x128xf32>
    %94 = vector.extract_strided_slice %87 {offsets = [0, 128], sizes = [8, 128], strides = [1, 1]} : vector<8x512xf32> to vector<8x128xf32>
    %95 = arith.negf %94 : vector<8x128xf32>
    %96 = math.exp %95 : vector<8x128xf32>
    %cst_54 = arith.constant 1.000000e+00 : f32
    %97 = vector.broadcast %cst_54 : f32 to vector<8x128xf32>
    %98 = arith.addf %97, %96 : vector<8x128xf32>
    %99 = arith.divf %97, %98 : vector<8x128xf32>
    %100 = vector.extract_strided_slice %87 {offsets = [0, 256], sizes = [8, 128], strides = [1, 1]} : vector<8x512xf32> to vector<8x128xf32>
    %101 = math.tanh %100 : vector<8x128xf32>
    %102 = vector.extract_strided_slice %87 {offsets = [0, 384], sizes = [8, 128], strides = [1, 1]} : vector<8x512xf32> to vector<8x128xf32>
    %103 = arith.negf %102 : vector<8x128xf32>
    %104 = math.exp %103 : vector<8x128xf32>
    %cst_55 = arith.constant 1.000000e+00 : f32
    %105 = vector.broadcast %cst_55 : f32 to vector<8x128xf32>
    %106 = arith.addf %105, %104 : vector<8x128xf32>
    %107 = arith.divf %105, %106 : vector<8x128xf32>
    %108 = arith.mulf %99, %75 : vector<8x128xf32>
    %109 = arith.mulf %93, %101 : vector<8x128xf32>
    %110 = arith.addf %108, %109 : vector<8x128xf32>
    %111 = math.tanh %110 : vector<8x128xf32>
    %112 = arith.mulf %107, %111 : vector<8x128xf32>
    %c1_56 = arith.constant 1 : index
    %c0_57 = arith.constant 0 : index
    %c0_58 = arith.constant 0 : index
    %113 = vector.load %arg9[%c1_56, %c0_57, %c0_58] : memref<2x8x128xf32, #tpu.memory_space<vmem>>, vector<1x8x128xf32>
    %114 = vector.shape_cast %113 : vector<1x8x128xf32> to vector<8x128xf32>
    %115 = vector.shape_cast %112 : vector<8x128xf32> to vector<1x8x128xf32>
    tpu.vector_store %arg9[%c1_56, %c0_57, %c0_58], %115 {strides = array<i32>} : memref<2x8x128xf32, #tpu.memory_space<vmem>>, vector<1x8x128xf32>,
    %c1_59 = arith.constant 1 : index
    %c0_60 = arith.constant 0 : index
    %c0_61 = arith.constant 0 : index
    %116 = vector.load %arg10[%c1_59, %c0_60, %c0_61] : memref<2x8x128xf32, #tpu.memory_space<vmem>>, vector<1x8x128xf32>
    %117 = vector.shape_cast %116 : vector<1x8x128xf32> to vector<8x128xf32>
    %118 = vector.shape_cast %110 : vector<8x128xf32> to vector<1x8x128xf32>
    tpu.vector_store %arg10[%c1_59, %c0_60, %c0_61], %118 {strides = array<i32>} : memref<2x8x128xf32, #tpu.memory_space<vmem>>, vector<1x8x128xf32>,
    %119 = arith.truncf %112 : vector<8x128xf32> to vector<8x128xbf16>
    %c0_62 = arith.constant 0 : index
    %c0_63 = arith.constant 0 : index
    %120 = vector.load %arg6[%c0_62, %c0_63] : memref<128x128xbf16, #tpu.memory_space<vmem>>, vector<128x128xbf16>
    %cst_64 = arith.constant dense<0.000000e+00> : vector<8x128xf32>
    %121 = tpu.matmul %119, %120, %cst_64 {dimension_numbers = #tpu.dot_dimension_numbers<[1], [0], [0], [1], [0, 0, 1, 1], [], []>} : vector<8x128xbf16>, vector<128x128xbf16>, vector<8x128xf32> -> vector<8x128xf32>
    %c0_65 = arith.constant 0 : index
    %c0_66 = arith.constant 0 : index
    %122 = vector.load %arg7[%c0_65, %c0_66] : memref<1x128xf32, #tpu.memory_space<vmem>>, vector<1x128xf32>
    %123 = vector.broadcast %122 : vector<1x128xf32> to vector<8x128xf32>
    %124 = arith.addf %121, %123 : vector<8x128xf32>
    %c0_67 = arith.constant 0 : index
    %c0_68 = arith.constant 0 : index
    %125 = vector.load %arg8[%c0_67, %c0_68] : memref<8x128xf32, #tpu.memory_space<vmem>>, vector<8x128xf32>
    tpu.vector_store %arg8[%c0_67, %c0_68], %124 {strides = array<i32>} : memref<8x128xf32, #tpu.memory_space<vmem>>, vector<8x128xf32>,
    return
  }
}

</mosaic_0001>

<llo_original>
// kernel: decoder_forward.1
$region0: #{decoder_forward.1}
  #allocation0 [shape = 'u32[]', space=smem, size = 0x4, offset = 0x4, fixed_abs, tag = 'smem constant byte address 0x4 - core index']
  #allocation1 [shape = 'u32[144,128]{1,0:T(1,128)}', space=vmem, size = 0x12000, scoped, tag = 'internal scratch']
  #allocation2 [shape = 'bf16[8,256]{1,0:T(8,128)(2,1)}', space=vmem, size = 0x1000, scoped, tag = 'scratch operand']
  %s0 = inlined_call_operand.vmem [shape: s32[8], index: 0, kind: input, shape index: {}]
  %s1 = inlined_call_operand.vmem [shape: f32[64,128], index: 1, kind: input, shape index: {}]
  %s2 = inlined_call_operand.hbm [shape: bf16[2,256,512], index: 2, kind: input, shape index: {}]
  %s3 = inlined_call_operand.hbm [shape: f32[2,1,512], index: 3, kind: input, shape index: {}]
  %s4 = inlined_call_operand.vmem [shape: f32[2,8,128], index: 4, kind: input, shape index: {}, may-alias: {4,9}]
  %s5 = inlined_call_operand.vmem [shape: f32[2,8,128], index: 5, kind: input, shape index: {}, may-alias: {5,10}]
  %s6 = inlined_call_operand.hbm [shape: bf16[128,128], index: 6, kind: input, shape index: {}]
  %s7 = inlined_call_operand.hbm [shape: f32[1,128], index: 7, kind: input, shape index: {}]
  %s8 = inlined_call_operand.hbm [shape: f32[8,128], index: 8, kind: output, shape index: {0}]
  %s9 = inlined_call_operand.vmem [shape: f32[2,8,128], index: 9, kind: output, shape index: {1}, may-alias: {4,9}]
  %s10 = inlined_call_operand.vmem [shape: f32[2,8,128], index: 10, kind: output, shape index: {2}, may-alias: {5,10}]
  %11 = xla_tuple %s8, %s9, %s10
  %s12 = sld [smem:[#allocation0]]
  $region78: #{decoder_forward.1} parent=0
    _
  %s14 = ssub.s32 1, %s12
  %s15 = scalar_select 0, %s14, %s12
  $region1: #{decoder_forward.1} parent=0
    #allocation3 [shape = 'u8[512]{0}', space=smem, size = 0x200, scoped, tag = 'input window, operand 0, single buffered']
    #allocation4 [shape = 's32[1]{0}', space=sflag, size = 0x4, scoped, tag = 'scoped memory for decoder_forward.1']
    #allocation5 [shape = 's32[1]{0}', space=sflag, size = 0x4, scoped, tag = 'scoped memory for decoder_forward.1']
    #allocation6 [shape = 's32[1]{0}', space=sflag, size = 0x4, scoped, tag = 'scoped memory for decoder_forward.1']
    #allocation7 [shape = 'u8[524288]{0}', space=vmem, size = 0x80000, scoped, tag = 'input window, operand 2, single buffered']
    #allocation8 [shape = 'u8[4096]{0}', space=vmem, size = 0x1000, scoped, tag = 'input window, operand 3, single buffered']
    #allocation9 [shape = 's32[1]{0}', space=sflag, size = 0x4, scoped, tag = 'scoped memory for decoder_forward.1']
    #allocation10 [shape = 'u8[32768]{0}', space=vmem, size = 0x8000, scoped, tag = 'input window, operand 6, single buffered']
    #allocation11 [shape = 'u8[512]{0}', space=vmem, size = 0x400, scoped, tag = 'input window, operand 7, single buffered']
    #allocation12 [shape = 's32[1]{0}', space=sflag, size = 0x4, scoped, tag = 'scoped memory for decoder_forward.1']
    #allocation13 [shape = 'u8[4096]{0}', space=vmem, size = 0x1000, scoped, tag = 'output window, operand 0, single buffered']
    %16 = vsyncpa [#allocation6], 0
    %17 = vsyncpa [#allocation4], 0
    %18 = vsyncpa [#allocation9], 0
    %19 = vsyncpa [#allocation12], 0
    %20 = vsyncpa [#allocation5], 0
    // Predicated region
    $region2: #{decoder_forward.1} parent=1 // pred_check
      _
    $region3: #{decoder_forward.1} parent=1 // pred_check_branch
      %22 = sbr.rel (0) target = $region5
    $region4: #{decoder_forward.1} parent=1 // pred_region
      %s24 = ssub.s32 16, 16
      %25 = vsyncadd [#allocation6], %s24
      %s27 = sshll.u32 %s0, 4
      %s28 = int_to_ptr.vmem [resolvable:$true] %s27
      %30 = dma.vmem_to_smem %s28, 16, [#allocation3], [#allocation6]
    $region5: #{decoder_forward.1} parent=1 // pred_fallthru
      _
    // Predicated region
    $region6: #{decoder_forward.1} parent=1 // pred_check
      _
    $region7: #{decoder_forward.1} parent=1 // pred_check_branch
      %32 = sbr.rel (0) target = $region9
    $region8: #{decoder_forward.1} parent=1 // pred_region
      _
    $region9: #{decoder_forward.1} parent=1 // pred_fallthru
      _
    // Predicated region
    $region10: #{decoder_forward.1} parent=1 // pred_check
      _
    $region11: #{decoder_forward.1} parent=1 // pred_check_branch
      %34 = sbr.rel (0) target = $region13
    $region12: #{decoder_forward.1} parent=1 // pred_region
      %s36 = ssub.s32 16384, 16384
      %37 = vsyncadd [#allocation4], %s36
      %s38 = sshll.u32 [#allocation7], 4
      %s39 = int_to_ptr.vmem [resolvable:$true] %s38
      %44 = dma.hbm_to_vmem [thread:$0]  %s2, 16384, %s39, [#allocation4], 256, 256, 16
    $region13: #{decoder_forward.1} parent=1 // pred_fallthru
      _
    // Predicated region
    $region14: #{decoder_forward.1} parent=1 // pred_check
      _
    $region15: #{decoder_forward.1} parent=1 // pred_check_branch
      %46 = sbr.rel (0) target = $region17
    $region16: #{decoder_forward.1} parent=1 // pred_region
      %s48 = ssub.s32 128, 128
      %49 = vsyncadd [#allocation9], %s48
      %s50 = sshll.u32 [#allocation8], 4
      %s51 = int_to_ptr.vmem [resolvable:$true] %s50
      %56 = dma.hbm_to_vmem [thread:$0]  %s3, 128, %s51, [#allocation9], 64, 64, 4
    $region17: #{decoder_forward.1} parent=1 // pred_fallthru
      _
    // Predicated region
    $region18: #{decoder_forward.1} parent=1 // pred_check
      _
    $region19: #{decoder_forward.1} parent=1 // pred_check_branch
      %58 = sbr.rel (0) target = $region21
    $region20: #{decoder_forward.1} parent=1 // pred_region
      _
    $region21: #{decoder_forward.1} parent=1 // pred_fallthru
      _
    // Predicated region
    $region22: #{decoder_forward.1} parent=1 // pred_check
      _
    $region23: #{decoder_forward.1} parent=1 // pred_check_branch
      %60 = sbr.rel (0) target = $region25
    $region24: #{decoder_forward.1} parent=1 // pred_region
      _
    $region25: #{decoder_forward.1} parent=1 // pred_fallthru
      _
    // Predicated region
    $region26: #{decoder_forward.1} parent=1 // pred_check
      _
    $region27: #{decoder_forward.1} parent=1 // pred_check_branch
      %62 = sbr.rel (0) target = $region29
    $region28: #{decoder_forward.1} parent=1 // pred_region
      %s64 = ssub.s32 1024, 1024
      %65 = vsyncadd [#allocation9], %s64
      %s66 = sshll.u32 [#allocation10], 4
      %s67 = int_to_ptr.vmem [resolvable:$true] %s66
      %72 = dma.hbm_to_vmem [thread:$0]  %s6, 1024, %s67, [#allocation9], 64, 64, 4
    $region29: #{decoder_forward.1} parent=1 // pred_fallthru
      _
    // Predicated region
    $region30: #{decoder_forward.1} parent=1 // pred_check
      _
    $region31: #{decoder_forward.1} parent=1 // pred_check_branch
      %74 = sbr.rel (0) target = $region33
    $region32: #{decoder_forward.1} parent=1 // pred_region
      %s76 = ssub.s32 16, 16
      %77 = vsyncadd [#allocation12], %s76
      %s79 = sshll.u32 [#allocation11], 4
      %s80 = int_to_ptr.vmem [resolvable:$true] %s79
      %82 = dma.hbm_to_vmem [thread:$0]  %s7, 16, %s80, [#allocation12]
    $region33: #{decoder_forward.1} parent=1 // pred_fallthru
      _
    // Predicated region
    $region34: #{decoder_forward.1} parent=1 // pred_check
      _
    $region35: #{decoder_forward.1} parent=1 // pred_check_branch
      %84 = sbr.rel (0) target = $region37
    $region36: #{decoder_forward.1} parent=1 // pred_region
      %85 = dma.done [#allocation6], 16
    $region37: #{decoder_forward.1} parent=1 // pred_fallthru
      _
    // Predicated region
    $region38: #{decoder_forward.1} parent=1 // pred_check
      _
    $region39: #{decoder_forward.1} parent=1 // pred_check_branch
      %87 = sbr.rel (0) target = $region41
    $region40: #{decoder_forward.1} parent=1 // pred_region
      %88 = dma.done [#allocation4], 16384
    $region41: #{decoder_forward.1} parent=1 // pred_fallthru
      _
    // Predicated region
    $region42: #{decoder_forward.1} parent=1 // pred_check
      _
    $region43: #{decoder_forward.1} parent=1 // pred_check_branch
      %90 = sbr.rel (0) target = $region45
    $region44: #{decoder_forward.1} parent=1 // pred_region
      %91 = dma.done [#allocation9], 128
    $region45: #{decoder_forward.1} parent=1 // pred_fallthru
      _
    // Predicated region
    $region46: #{decoder_forward.1} parent=1 // pred_check
      _
    $region47: #{decoder_forward.1} parent=1 // pred_check_branch
      %93 = sbr.rel (0) target = $region49
    $region48: #{decoder_forward.1} parent=1 // pred_region
      %94 = dma.done [#allocation9], 1024
    $region49: #{decoder_forward.1} parent=1 // pred_fallthru
      _
    // Predicated region
    $region50: #{decoder_forward.1} parent=1 // pred_check
      _
    $region51: #{decoder_forward.1} parent=1 // pred_check_branch
      %96 = sbr.rel (0) target = $region53
    $region52: #{decoder_forward.1} parent=1 // pred_region
      %97 = dma.done [#allocation12], 16
    $region53: #{decoder_forward.1} parent=1 // pred_fallthru
      _
    %98 = sfence
    %s100 = sld [smem:[#allocation3]]
    %s101 = scalar_lea.vmem %s1, %s100
    %v102 = vld [vmem:[%s101] sm:$0x1]
    %s103 = sld [smem:[#allocation3 + $0x1]]
    %s104 = scalar_lea.vmem %s1, %s103
    %v105 = vld [vmem:[%s104] sm:$0x1]
    %s106 = sld [smem:[#allocation3 + $0x2]]
    %s107 = scalar_lea.vmem %s1, %s106
    %v108 = vld [vmem:[%s107] sm:$0x1]
    %s109 = sld [smem:[#allocation3 + $0x3]]
    %s110 = scalar_lea.vmem %s1, %s109
    %v111 = vld [vmem:[%s110] sm:$0x1]
    %s112 = sld [smem:[#allocation3 + $0x4]]
    %s113 = scalar_lea.vmem %s1, %s112
    %v114 = vld [vmem:[%s113] sm:$0x1]
    %s115 = sld [smem:[#allocation3 + $0x5]]
    %s116 = scalar_lea.vmem %s1, %s115
    %v117 = vld [vmem:[%s116] sm:$0x1]
    %s118 = sld [smem:[#allocation3 + $0x6]]
    %s119 = scalar_lea.vmem %s1, %s118
    %v120 = vld [vmem:[%s119] sm:$0x1]
    %s121 = sld [smem:[#allocation3 + $0x7]]
    %s122 = scalar_lea.vmem %s1, %s121
    %v123 = vld [vmem:[%s122] sm:$0x1]
    %v125 = vrot.slane %v105, 7
    %v128 = vrot.slane %v108, 6
    %v131 = vrot.slane %v111, 5
    %v134 = vrot.slane %v114, 4
    %v137 = vrot.slane %v117, 3
    %v140 = vrot.slane %v120, 2
    %v143 = vrot.slane %v123, 1
    %vm145 = vcmask 1040384
    %v146 = vsel %vm145, %v102, %v125
    %vm147 = vcmask 1041408
    %v148 = vsel %vm147, %v146, %v128
    %vm149 = vcmask 1042432
    %v150 = vsel %vm149, %v148, %v131
    %vm151 = vcmask 1043456
    %v152 = vsel %vm151, %v150, %v134
    %vm153 = vcmask 1044480
    %v154 = vsel %vm153, %v152, %v137
    %vm155 = vcmask 1045504
    %v156 = vsel %vm155, %v154, %v140
    %vm157 = vcmask 1046528
    %v158 = vsel %vm157, %v156, %v143
    %v159 = vpack.c.bf16 %v158, %v158
    %160 = vst [vmem:[#allocation2] sm:$0xf] %v159
    %v161 = vld [vmem:[%s5] sm:$0xff]
    %v162 = vld [vmem:[%s4] sm:$0xff]
    %v163 = vpack.c.bf16 %v162, %v162
    %164 = vst [vmem:[#allocation2 + $0x4] sm:$0xf] %v163
    %v165 = vld [vmem:[#allocation2] sm:$0xff]
    %v166 = vld [vmem:[#allocation7] sm:$0xff]
    %v167 = vld [vmem:[#allocation7 + $0x8] sm:$0xff]
    %v168 = vld [vmem:[#allocation7 + $0x10] sm:$0xff]
    %v169 = vld [vmem:[#allocation7 + $0x18] sm:$0xff]
    %v170 = vld [vmem:[#allocation7 + $0x20] sm:$0xff]
    %v171 = vld [vmem:[#allocation7 + $0x28] sm:$0xff]
    %v172 = vld [vmem:[#allocation7 + $0x30] sm:$0xff]
    %v173 = vld [vmem:[#allocation7 + $0x38] sm:$0xff]
    %v174 = vld [vmem:[#allocation7 + $0x40] sm:$0xff]
    %v175 = vld [vmem:[#allocation7 + $0x48] sm:$0xff]
    %v176 = vld [vmem:[#allocation7 + $0x50] sm:$0xff]
    %v177 = vld [vmem:[#allocation7 + $0x58] sm:$0xff]
    %v178 = vld [vmem:[#allocation7 + $0x60] sm:$0xff]
    %v179 = vld [vmem:[#allocation7 + $0x68] sm:$0xff]
    %v180 = vld [vmem:[#allocation7 + $0x70] sm:$0xff]
    %v181 = vld [vmem:[#allocation7 + $0x78] sm:$0xff]
    %v182 = vld [vmem:[#allocation7 + $0x80] sm:$0xff]
    %v183 = vld [vmem:[#allocation7 + $0x88] sm:$0xff]
    %v184 = vld [vmem:[#allocation7 + $0x90] sm:$0xff]
    %v185 = vld [vmem:[#allocation7 + $0x98] sm:$0xff]
    %v186 = vld [vmem:[#allocation7 + $0xa0] sm:$0xff]
    %v187 = vld [vmem:[#allocation7 + $0xa8] sm:$0xff]
    %v188 = vld [vmem:[#allocation7 + $0xb0] sm:$0xff]
    %v189 = vld [vmem:[#allocation7 + $0xb8] sm:$0xff]
    %v190 = vld [vmem:[#allocation7 + $0xc0] sm:$0xff]
    %v191 = vld [vmem:[#allocation7 + $0xc8] sm:$0xff]
    %v192 = vld [vmem:[#allocation7 + $0xd0] sm:$0xff]
    %v193 = vld [vmem:[#allocation7 + $0xd8] sm:$0xff]
    %v194 = vld [vmem:[#allocation7 + $0xe0] sm:$0xff]
    %v195 = vld [vmem:[#allocation7 + $0xe8] sm:$0xff]
    %v196 = vld [vmem:[#allocation7 + $0xf0] sm:$0xff]
    %v197 = vld [vmem:[#allocation7 + $0xf8] sm:$0xff]
    %v198 = vld [vmem:[#allocation7 + $0x100] sm:$0xff]
    %v199 = vld [vmem:[#allocation7 + $0x108] sm:$0xff]
    %v200 = vld [vmem:[#allocation7 + $0x110] sm:$0xff]
    %v201 = vld [vmem:[#allocation7 + $0x118] sm:$0xff]
    %v202 = vld [vmem:[#allocation7 + $0x120] sm:$0xff]
    %v203 = vld [vmem:[#allocation7 + $0x128] sm:$0xff]
    %v204 = vld [vmem:[#allocation7 + $0x130] sm:$0xff]
    %v205 = vld [vmem:[#allocation7 + $0x138] sm:$0xff]
    %v206 = vld [vmem:[#allocation7 + $0x140] sm:$0xff]
    %v207 = vld [vmem:[#allocation7 + $0x148] sm:$0xff]
    %v208 = vld [vmem:[#allocation7 + $0x150] sm:$0xff]
    %v209 = vld [vmem:[#allocation7 + $0x158] sm:$0xff]
    %v210 = vld [vmem:[#allocation7 + $0x160] sm:$0xff]
    %v211 = vld [vmem:[#allocation7 + $0x168] sm:$0xff]
    %v212 = vld [vmem:[#allocation7 + $0x170] sm:$0xff]
    %v213 = vld [vmem:[#allocation7 + $0x178] sm:$0xff]
    %v214 = vld [vmem:[#allocation7 + $0x180] sm:$0xff]
    %v215 = vld [vmem:[#allocation7 + $0x188] sm:$0xff]
    %v216 = vld [vmem:[#allocation7 + $0x190] sm:$0xff]
    %v217 = vld [vmem:[#allocation7 + $0x198] sm:$0xff]
    %v218 = vld [vmem:[#allocation7 + $0x1a0] sm:$0xff]
    %v219 = vld [vmem:[#allocation7 + $0x1a8] sm:$0xff]
    %v220 = vld [vmem:[#allocation7 + $0x1b0] sm:$0xff]
    %v221 = vld [vmem:[#allocation7 + $0x1b8] sm:$0xff]
    %v222 = vld [vmem:[#allocation7 + $0x1c0] sm:$0xff]
    %v223 = vld [vmem:[#allocation7 + $0x1c8] sm:$0xff]
    %v224 = vld [vmem:[#allocation7 + $0x1d0] sm:$0xff]
    %v225 = vld [vmem:[#allocation7 + $0x1d8] sm:$0xff]
    %v226 = vld [vmem:[#allocation7 + $0x1e0] sm:$0xff]
    %v227 = vld [vmem:[#allocation7 + $0x1e8] sm:$0xff]
    %v228 = vld [vmem:[#allocation7 + $0x1f0] sm:$0xff]
    %v229 = vld [vmem:[#allocation7 + $0x1f8] sm:$0xff]
    %v230 = vld [vmem:[#allocation8] sm:$0xf]
    %v232 = vlaneseq
    %v233 = vshrl.u32 %v232, 7
    %v234 = vsub.s32 0, %v233
    %v235 = vrot.slane %v230, %v234
    %v236 = vlaneseq
    %v237 = vshrl.u32 %v236, 7
    %v238 = vsub.s32 1, %v237
    %v239 = vrot.slane %v230, %v238
    %v240 = vlaneseq
    %v241 = vshrl.u32 %v240, 7
    %v242 = vsub.s32 2, %v241
    %v243 = vrot.slane %v230, %v242
    %v244 = vlaneseq
    %v245 = vshrl.u32 %v244, 7
    %v246 = vsub.s32 3, %v245
    %v247 = vrot.slane %v230, %v246
    %v253 = vunpack.c.l.b16 %v165
    %v254 = vunpack.c.h.b16 %v165
    %v255 = vpack.c.b16 %v253, %v253
    %v256 = vpack.c.b16 %v254, %v254
    %v323 = vunpack.c.l.b16 %v166
    %v324 = vunpack.c.h.b16 %v166
    %v325 = vunpack.c.l.b16 %v167
    %v326 = vunpack.c.h.b16 %v167
    %v327 = vunpack.c.l.b16 %v168
    %v328 = vunpack.c.h.b16 %v168
    %v329 = vunpack.c.l.b16 %v169
    %v330 = vunpack.c.h.b16 %v169
    %v331 = vunpack.c.l.b16 %v170
    %v332 = vunpack.c.h.b16 %v170
    %v333 = vunpack.c.l.b16 %v171
    %v334 = vunpack.c.h.b16 %v171
    %v335 = vunpack.c.l.b16 %v172
    %v336 = vunpack.c.h.b16 %v172
    %v337 = vunpack.c.l.b16 %v173
    %v338 = vunpack.c.h.b16 %v173
    %v339 = vunpack.c.l.b16 %v174
    %v340 = vunpack.c.h.b16 %v174
    %v341 = vunpack.c.l.b16 %v175
    %v342 = vunpack.c.h.b16 %v175
    %v343 = vunpack.c.l.b16 %v176
    %v344 = vunpack.c.h.b16 %v176
    %v345 = vunpack.c.l.b16 %v177
    %v346 = vunpack.c.h.b16 %v177
    %v347 = vunpack.c.l.b16 %v178
    %v348 = vunpack.c.h.b16 %v178
    %v349 = vunpack.c.l.b16 %v179
    %v350 = vunpack.c.h.b16 %v179
    %v351 = vunpack.c.l.b16 %v180
    %v352 = vunpack.c.h.b16 %v180
    %v353 = vunpack.c.l.b16 %v181
    %v354 = vunpack.c.h.b16 %v181
    %v355 = vunpack.c.l.b16 %v182
    %v356 = vunpack.c.h.b16 %v182
    %v357 = vunpack.c.l.b16 %v183
    %v358 = vunpack.c.h.b16 %v183
    %v359 = vunpack.c.l.b16 %v184
    %v360 = vunpack.c.h.b16 %v184
    %v361 = vunpack.c.l.b16 %v185
    %v362 = vunpack.c.h.b16 %v185
    %v363 = vunpack.c.l.b16 %v186
    %v364 = vunpack.c.h.b16 %v186
    %v365 = vunpack.c.l.b16 %v187
    %v366 = vunpack.c.h.b16 %v187
    %v367 = vunpack.c.l.b16 %v188
    %v368 = vunpack.c.h.b16 %v188
    %v369 = vunpack.c.l.b16 %v189
    %v370 = vunpack.c.h.b16 %v189
    %v371 = vunpack.c.l.b16 %v190
    %v372 = vunpack.c.h.b16 %v190
    %v373 = vunpack.c.l.b16 %v191
    %v374 = vunpack.c.h.b16 %v191
    %v375 = vunpack.c.l.b16 %v192
    %v376 = vunpack.c.h.b16 %v192
    %v377 = vunpack.c.l.b16 %v193
    %v378 = vunpack.c.h.b16 %v193
    %v379 = vunpack.c.l.b16 %v194
    %v380 = vunpack.c.h.b16 %v194
    %v381 = vunpack.c.l.b16 %v195
    %v382 = vunpack.c.h.b16 %v195
    %v383 = vunpack.c.l.b16 %v196
    %v384 = vunpack.c.h.b16 %v196
    %v385 = vunpack.c.l.b16 %v197
    %v386 = vunpack.c.h.b16 %v197
    %v387 = vunpack.c.l.b16 %v198
    %v388 = vunpack.c.h.b16 %v198
    %v389 = vunpack.c.l.b16 %v199
    %v390 = vunpack.c.h.b16 %v199
    %v391 = vunpack.c.l.b16 %v200
    %v392 = vunpack.c.h.b16 %v200
    %v393 = vunpack.c.l.b16 %v201
    %v394 = vunpack.c.h.b16 %v201
    %v395 = vunpack.c.l.b16 %v202
    %v396 = vunpack.c.h.b16 %v202
    %v397 = vunpack.c.l.b16 %v203
    %v398 = vunpack.c.h.b16 %v203
    %v399 = vunpack.c.l.b16 %v204
    %v400 = vunpack.c.h.b16 %v204
    %v401 = vunpack.c.l.b16 %v205
    %v402 = vunpack.c.h.b16 %v205
    %v403 = vunpack.c.l.b16 %v206
    %v404 = vunpack.c.h.b16 %v206
    %v405 = vunpack.c.l.b16 %v207
    %v406 = vunpack.c.h.b16 %v207
    %v407 = vunpack.c.l.b16 %v208
    %v408 = vunpack.c.h.b16 %v208
    %v409 = vunpack.c.l.b16 %v209
    %v410 = vunpack.c.h.b16 %v209
    %v411 = vunpack.c.l.b16 %v210
    %v412 = vunpack.c.h.b16 %v210
    %v413 = vunpack.c.l.b16 %v211
    %v414 = vunpack.c.h.b16 %v211
    %v415 = vunpack.c.l.b16 %v212
    %v416 = vunpack.c.h.b16 %v212
    %v417 = vunpack.c.l.b16 %v213
    %v418 = vunpack.c.h.b16 %v213
    %v419 = vunpack.c.l.b16 %v214
    %v420 = vunpack.c.h.b16 %v214
    %v421 = vunpack.c.l.b16 %v215
    %v422 = vunpack.c.h.b16 %v215
    %v423 = vunpack.c.l.b16 %v216
    %v424 = vunpack.c.h.b16 %v216
    %v425 = vunpack.c.l.b16 %v217
    %v426 = vunpack.c.h.b16 %v217
    %v427 = vunpack.c.l.b16 %v218
    %v428 = vunpack.c.h.b16 %v218
    %v429 = vunpack.c.l.b16 %v219
    %v430 = vunpack.c.h.b16 %v219
    %v431 = vunpack.c.l.b16 %v220
    %v432 = vunpack.c.h.b16 %v220
    %v433 = vunpack.c.l.b16 %v221
    %v434 = vunpack.c.h.b16 %v221
    %v435 = vunpack.c.l.b16 %v222
    %v436 = vunpack.c.h.b16 %v222
    %v437 = vunpack.c.l.b16 %v223
    %v438 = vunpack.c.h.b16 %v223
    %v439 = vunpack.c.l.b16 %v224
    %v440 = vunpack.c.h.b16 %v224
    %v441 = vunpack.c.l.b16 %v225
    %v442 = vunpack.c.h.b16 %v225
    %v443 = vunpack.c.l.b16 %v226
    %v444 = vunpack.c.h.b16 %v226
    %v445 = vunpack.c.l.b16 %v227
    %v446 = vunpack.c.h.b16 %v227
    %v447 = vunpack.c.l.b16 %v228
    %v448 = vunpack.c.h.b16 %v228
    %v449 = vunpack.c.l.b16 %v229
    %v450 = vunpack.c.h.b16 %v229
    %v451 = vpack.c.b16 %v327, %v323
    %v452 = vpack.c.b16 %v328, %v324
    %v453 = vpack.c.b16 %v329, %v325
    %v454 = vpack.c.b16 %v330, %v326
    %v455 = vpack.c.b16 %v335, %v331
    %v456 = vpack.c.b16 %v336, %v332
    %v457 = vpack.c.b16 %v337, %v333
    %v458 = vpack.c.b16 %v338, %v334
    %v459 = vpack.c.b16 %v343, %v339
    %v460 = vpack.c.b16 %v344, %v340
    %v461 = vpack.c.b16 %v345, %v341
    %v462 = vpack.c.b16 %v346, %v342
    %v463 = vpack.c.b16 %v351, %v347
    %v464 = vpack.c.b16 %v352, %v348
    %v465 = vpack.c.b16 %v353, %v349
    %v466 = vpack.c.b16 %v354, %v350
    %v467 = vpack.c.b16 %v359, %v355
    %v468 = vpack.c.b16 %v360, %v356
    %v469 = vpack.c.b16 %v361, %v357
    %v470 = vpack.c.b16 %v362, %v358
    %v471 = vpack.c.b16 %v367, %v363
    %v472 = vpack.c.b16 %v368, %v364
    %v473 = vpack.c.b16 %v369, %v365
    %v474 = vpack.c.b16 %v370, %v366
    %v475 = vpack.c.b16 %v375, %v371
    %v476 = vpack.c.b16 %v376, %v372
    %v477 = vpack.c.b16 %v377, %v373
    %v478 = vpack.c.b16 %v378, %v374
    %v479 = vpack.c.b16 %v383, %v379
    %v480 = vpack.c.b16 %v384, %v380
    %v481 = vpack.c.b16 %v385, %v381
    %v482 = vpack.c.b16 %v386, %v382
    %v483 = vpack.c.b16 %v391, %v387
    %v484 = vpack.c.b16 %v392, %v388
    %v485 = vpack.c.b16 %v393, %v389
    %v486 = vpack.c.b16 %v394, %v390
    %v487 = vpack.c.b16 %v399, %v395
    %v488 = vpack.c.b16 %v400, %v396
    %v489 = vpack.c.b16 %v401, %v397
    %v490 = vpack.c.b16 %v402, %v398
    %v491 = vpack.c.b16 %v407, %v403
    %v492 = vpack.c.b16 %v408, %v404
    %v493 = vpack.c.b16 %v409, %v405
    %v494 = vpack.c.b16 %v410, %v406
    %v495 = vpack.c.b16 %v415, %v411
    %v496 = vpack.c.b16 %v416, %v412
    %v497 = vpack.c.b16 %v417, %v413
    %v498 = vpack.c.b16 %v418, %v414
    %v499 = vpack.c.b16 %v423, %v419
    %v500 = vpack.c.b16 %v424, %v420
    %v501 = vpack.c.b16 %v425, %v421
    %v502 = vpack.c.b16 %v426, %v422
    %v503 = vpack.c.b16 %v431, %v427
    %v504 = vpack.c.b16 %v432, %v428
    %v505 = vpack.c.b16 %v433, %v429
    %v506 = vpack.c.b16 %v434, %v430
    %v507 = vpack.c.b16 %v439, %v435
    %v508 = vpack.c.b16 %v440, %v436
    %v509 = vpack.c.b16 %v441, %v437
    %v510 = vpack.c.b16 %v442, %v438
    %v511 = vpack.c.b16 %v447, %v443
    %v512 = vpack.c.b16 %v448, %v444
    %v513 = vpack.c.b16 %v449, %v445
    %v514 = vpack.c.b16 %v450, %v446
    %579 = vmatprep.subr.bf16.mxu0 %v480
    %580 = vmatpush1.bf16.msra.mxu0 %v479
    %581 = vmatprep.subr.bf16.mxu0 %v476
    %582 = vmatpush1.bf16.msra.mxu0 %v475
    %583 = vmatprep.subr.bf16.mxu0 %v472
    %584 = vmatpush1.bf16.msra.mxu0 %v471
    %585 = vmatprep.subr.bf16.mxu0 %v468
    %586 = vmatpush1.bf16.msra.mxu0 %v467
    %587 = vmatprep.subr.bf16.mxu0 %v464
    %588 = vmatpush1.bf16.msra.mxu0 %v463
    %589 = vmatprep.subr.bf16.mxu0 %v460
    %590 = vmatpush1.bf16.msra.mxu0 %v459
    %591 = vmatprep.subr.bf16.mxu0 %v456
    %592 = vmatpush1.bf16.msra.mxu0 %v455
    %593 = vmatprep.subr.bf16.mxu0 %v452
    %594 = vmatpush1.bf16.msra.mxu0 %v451
    %595 = vmatprep.subr.bf16.mxu0 %v512
    %596 = vmatpush2.bf16.msra.mxu0 %v511
    %597 = vmatprep.subr.bf16.mxu0 %v508
    %598 = vmatpush2.bf16.msra.mxu0 %v507
    %599 = vmatprep.subr.bf16.mxu0 %v504
    %600 = vmatpush2.bf16.msra.mxu0 %v503
    %601 = vmatprep.subr.bf16.mxu0 %v500
    %602 = vmatpush2.bf16.msra.mxu0 %v499
    %603 = vmatprep.subr.bf16.mxu0 %v496
    %604 = vmatpush2.bf16.msra.mxu0 %v495
    %605 = vmatprep.subr.bf16.mxu0 %v492
    %606 = vmatpush2.bf16.msra.mxu0 %v491
    %607 = vmatprep.subr.bf16.mxu0 %v488
    %608 = vmatpush2.bf16.msra.mxu0 %v487
    %609 = vmatprep.subr.bf16.mxu0 %v484
    %610 = vmatpush2.bf16.msra.mxu0 %v483
    %611 = vmatprep.mubr.bf16.mxu0 %v256
    %612 = vmatmul.mubr.bf16.gmra.mxu0 %v255
    %v613 = vpop.f32.mrf.mxu0
    %v614 = vadd.f32 %v235, %v613
    %v615 = vpop.f32.mrf.mxu0
    %v616 = vadd.f32 %v239, %v615
    %v617 = vpop.f32.mrf.mxu0
    %v618 = vpop.f32.mrf.mxu0
    %619 = vdwg.mxu0
    %620 = vmatprep.subr.bf16.mxu0 %v482
    %621 = vmatpush1.bf16.msra.mxu0 %v481
    %622 = vmatprep.subr.bf16.mxu0 %v478
    %623 = vmatpush1.bf16.msra.mxu0 %v477
    %624 = vmatprep.subr.bf16.mxu0 %v474
    %625 = vmatpush1.bf16.msra.mxu0 %v473
    %626 = vmatprep.subr.bf16.mxu0 %v470
    %627 = vmatpush1.bf16.msra.mxu0 %v469
    %628 = vmatprep.subr.bf16.mxu0 %v466
    %629 = vmatpush1.bf16.msra.mxu0 %v465
    %630 = vmatprep.subr.bf16.mxu0 %v462
    %631 = vmatpush1.bf16.msra.mxu0 %v461
    %632 = vmatprep.subr.bf16.mxu0 %v458
    %633 = vmatpush1.bf16.msra.mxu0 %v457
    %634 = vmatprep.subr.bf16.mxu0 %v454
    %635 = vmatpush1.bf16.msra.mxu0 %v453
    %636 = vmatprep.subr.bf16.mxu0 %v514
    %637 = vmatpush2.bf16.msra.mxu0 %v513
    %638 = vmatprep.subr.bf16.mxu0 %v510
    %639 = vmatpush2.bf16.msra.mxu0 %v509
    %640 = vmatprep.subr.bf16.mxu0 %v506
    %641 = vmatpush2.bf16.msra.mxu0 %v505
    %642 = vmatprep.subr.bf16.mxu0 %v502
    %643 = vmatpush2.bf16.msra.mxu0 %v501
    %644 = vmatprep.subr.bf16.mxu0 %v498
    %645 = vmatpush2.bf16.msra.mxu0 %v497
    %646 = vmatprep.subr.bf16.mxu0 %v494
    %647 = vmatpush2.bf16.msra.mxu0 %v493
    %648 = vmatprep.subr.bf16.mxu0 %v490
    %649 = vmatpush2.bf16.msra.mxu0 %v489
    %650 = vmatprep.subr.bf16.mxu0 %v486
    %651 = vmatpush2.bf16.msra.mxu0 %v485
    %652 = vmatprep.mubr.bf16.mxu0 %v256
    %653 = vmatmul.mubr.bf16.gmra.mxu0 %v255
    %v654 = vpop.f32.mrf.mxu0
    %v655 = vadd.f32 %v243, %v654
    %v656 = vpop.f32.mrf.mxu0
    %v657 = vadd.f32 %v247, %v656
    %v658 = vpop.f32.mrf.mxu0
    %v659 = vpop.f32.mrf.mxu0
    %660 = vdwg.mxu0
    %v661 = vxor.u32 %v614, 2147483648
    %v662 = vmul.f32 %v661, 1.442695
    %v663 = vpow.pop %v662
    %v664 = vadd.f32 %v663, 1.0
    %v665 = vrcp.pop %v664
    %v666 = vmul.f32 1.0, %v665
    %v667 = vxor.u32 %v616, 2147483648
    %v668 = vmul.f32 %v667, 1.442695
    %v669 = vpow.pop %v668
    %v670 = vadd.f32 %v669, 1.0
    %v671 = vrcp.pop %v670
    %v672 = vmul.f32 1.0, %v671
    %v673 = vtanh.pop %v655
    %v674 = vxor.u32 %v657, 2147483648
    %v675 = vmul.f32 %v674, 1.442695
    %v676 = vpow.pop %v675
    %v677 = vadd.f32 %v676, 1.0
    %v678 = vrcp.pop %v677
    %v679 = vmul.f32 1.0, %v678
    %v680 = vmul.f32 %v672, %v161
    %v681 = vmul.f32 %v666, %v673
    %v682 = vadd.f32 %v680, %v681
    %v683 = vtanh.pop %v682
    %v684 = vmul.f32 %v679, %v683
    %685 = vst [vmem:[%s9] sm:$0xff] %v684
    %686 = vst [vmem:[%s10] sm:$0xff] %v682
    %v687 = vpack.c.bf16 %v684, %v684
    %688 = vst [vmem:[#allocation2] sm:$0xf] %v687
    %s689 = scalar_lea.vmem %s5, 8
    %v690 = vld [vmem:[%s689] sm:$0xff]
    %s691 = scalar_lea.vmem %s4, 8
    %v692 = vld [vmem:[%s691] sm:$0xff]
    %v693 = vpack.c.bf16 %v692, %v692
    %694 = vst [vmem:[#allocation2 + $0x4] sm:$0xf] %v693
    %v695 = vld [vmem:[#allocation2] sm:$0xff]
    %s696 = scalar_lea.vmem [#allocation7], 512
    %v697 = vld [vmem:[%s696] sm:$0xff]
    %v698 = vld [vmem:[%s696 + $0x8] sm:$0xff]
    %v699 = vld [vmem:[%s696 + $0x10] sm:$0xff]
    %v700 = vld [vmem:[%s696 + $0x18] sm:$0xff]
    %v701 = vld [vmem:[%s696 + $0x20] sm:$0xff]
    %v702 = vld [vmem:[%s696 + $0x28] sm:$0xff]
    %v703 = vld [vmem:[%s696 + $0x30] sm:$0xff]
    %v704 = vld [vmem:[%s696 + $0x38] sm:$0xff]
    %v705 = vld [vmem:[%s696 + $0x40] sm:$0xff]
    %v706 = vld [vmem:[%s696 + $0x48] sm:$0xff]
    %v707 = vld [vmem:[%s696 + $0x50] sm:$0xff]
    %v708 = vld [vmem:[%s696 + $0x58] sm:$0xff]
    %v709 = vld [vmem:[%s696 + $0x60] sm:$0xff]
    %v710 = vld [vmem:[%s696 + $0x68] sm:$0xff]
    %v711 = vld [vmem:[%s696 + $0x70] sm:$0xff]
    %v712 = vld [vmem:[%s696 + $0x78] sm:$0xff]
    %v713 = vld [vmem:[%s696 + $0x80] sm:$0xff]
    %v714 = vld [vmem:[%s696 + $0x88] sm:$0xff]
    %v715 = vld [vmem:[%s696 + $0x90] sm:$0xff]
    %v716 = vld [vmem:[%s696 + $0x98] sm:$0xff]
    %v717 = vld [vmem:[%s696 + $0xa0] sm:$0xff]
    %v718 = vld [vmem:[%s696 + $0xa8] sm:$0xff]
    %v719 = vld [vmem:[%s696 + $0xb0] sm:$0xff]
    %v720 = vld [vmem:[%s696 + $0xb8] sm:$0xff]
    %v721 = vld [vmem:[%s696 + $0xc0] sm:$0xff]
    %v722 = vld [vmem:[%s696 + $0xc8] sm:$0xff]
    %v723 = vld [vmem:[%s696 + $0xd0] sm:$0xff]
    %v724 = vld [vmem:[%s696 + $0xd8] sm:$0xff]
    %v725 = vld [vmem:[%s696 + $0xe0] sm:$0xff]
    %v726 = vld [vmem:[%s696 + $0xe8] sm:$0xff]
    %v727 = vld [vmem:[%s696 + $0xf0] sm:$0xff]
    %v728 = vld [vmem:[%s696 + $0xf8] sm:$0xff]
    %v729 = vld [vmem:[%s696 + $0x100] sm:$0xff]
    %v730 = vld [vmem:[%s696 + $0x108] sm:$0xff]
    %v731 = vld [vmem:[%s696 + $0x110] sm:$0xff]
    %v732 = vld [vmem:[%s696 + $0x118] sm:$0xff]
    %v733 = vld [vmem:[%s696 + $0x120] sm:$0xff]
    %v734 = vld [vmem:[%s696 + $0x128] sm:$0xff]
    %v735 = vld [vmem:[%s696 + $0x130] sm:$0xff]
    %v736 = vld [vmem:[%s696 + $0x138] sm:$0xff]
    %v737 = vld [vmem:[%s696 + $0x140] sm:$0xff]
    %v738 = vld [vmem:[%s696 + $0x148] sm:$0xff]
    %v739 = vld [vmem:[%s696 + $0x150] sm:$0xff]
    %v740 = vld [vmem:[%s696 + $0x158] sm:$0xff]
    %v741 = vld [vmem:[%s696 + $0x160] sm:$0xff]
    %v742 = vld [vmem:[%s696 + $0x168] sm:$0xff]
    %v743 = vld [vmem:[%s696 + $0x170] sm:$0xff]
    %v744 = vld [vmem:[%s696 + $0x178] sm:$0xff]
    %v745 = vld [vmem:[%s696 + $0x180] sm:$0xff]
    %v746 = vld [vmem:[%s696 + $0x188] sm:$0xff]
    %v747 = vld [vmem:[%s696 + $0x190] sm:$0xff]
    %v748 = vld [vmem:[%s696 + $0x198] sm:$0xff]
    %v749 = vld [vmem:[%s696 + $0x1a0] sm:$0xff]
    %v750 = vld [vmem:[%s696 + $0x1a8] sm:$0xff]
    %v751 = vld [vmem:[%s696 + $0x1b0] sm:$0xff]
    %v752 = vld [vmem:[%s696 + $0x1b8] sm:$0xff]
    %v753 = vld [vmem:[%s696 + $0x1c0] sm:$0xff]
    %v754 = vld [vmem:[%s696 + $0x1c8] sm:$0xff]
    %v755 = vld [vmem:[%s696 + $0x1d0] sm:$0xff]
    %v756 = vld [vmem:[%s696 + $0x1d8] sm:$0xff]
    %v757 = vld [vmem:[%s696 + $0x1e0] sm:$0xff]
    %v758 = vld [vmem:[%s696 + $0x1e8] sm:$0xff]
    %v759 = vld [vmem:[%s696 + $0x1f0] sm:$0xff]
    %v760 = vld [vmem:[%s696 + $0x1f8] sm:$0xff]
    %s761 = scalar_lea.vmem [#allocation8], 4
    %v762 = vld [vmem:[%s761] sm:$0xf]
    %v764 = vlaneseq
    %v765 = vshrl.u32 %v764, 7
    %v766 = vsub.s32 0, %v765
    %v767 = vrot.slane %v762, %v766
    %v768 = vlaneseq
    %v769 = vshrl.u32 %v768, 7
    %v770 = vsub.s32 1, %v769
    %v771 = vrot.slane %v762, %v770
    %v772 = vlaneseq
    %v773 = vshrl.u32 %v772, 7
    %v774 = vsub.s32 2, %v773
    %v775 = vrot.slane %v762, %v774
    %v776 = vlaneseq
    %v777 = vshrl.u32 %v776, 7
    %v778 = vsub.s32 3, %v777
    %v779 = vrot.slane %v762, %v778
    %v785 = vunpack.c.l.b16 %v695
    %v786 = vunpack.c.h.b16 %v695
    %v787 = vpack.c.b16 %v785, %v785
    %v788 = vpack.c.b16 %v786, %v786
    %v855 = vunpack.c.l.b16 %v697
    %v856 = vunpack.c.h.b16 %v697
    %v857 = vunpack.c.l.b16 %v698
    %v858 = vunpack.c.h.b16 %v698
    %v859 = vunpack.c.l.b16 %v699
    %v860 = vunpack.c.h.b16 %v699
    %v861 = vunpack.c.l.b16 %v700
    %v862 = vunpack.c.h.b16 %v700
    %v863 = vunpack.c.l.b16 %v701
    %v864 = vunpack.c.h.b16 %v701
    %v865 = vunpack.c.l.b16 %v702
    %v866 = vunpack.c.h.b16 %v702
    %v867 = vunpack.c.l.b16 %v703
    %v868 = vunpack.c.h.b16 %v703
    %v869 = vunpack.c.l.b16 %v704
    %v870 = vunpack.c.h.b16 %v704
    %v871 = vunpack.c.l.b16 %v705
    %v872 = vunpack.c.h.b16 %v705
    %v873 = vunpack.c.l.b16 %v706
    %v874 = vunpack.c.h.b16 %v706
    %v875 = vunpack.c.l.b16 %v707
    %v876 = vunpack.c.h.b16 %v707
    %v877 = vunpack.c.l.b16 %v708
    %v878 = vunpack.c.h.b16 %v708
    %v879 = vunpack.c.l.b16 %v709
    %v880 = vunpack.c.h.b16 %v709
    %v881 = vunpack.c.l.b16 %v710
    %v882 = vunpack.c.h.b16 %v710
    %v883 = vunpack.c.l.b16 %v711
    %v884 = vunpack.c.h.b16 %v711
    %v885 = vunpack.c.l.b16 %v712
    %v886 = vunpack.c.h.b16 %v712
    %v887 = vunpack.c.l.b16 %v713
    %v888 = vunpack.c.h.b16 %v713
    %v889 = vunpack.c.l.b16 %v714
    %v890 = vunpack.c.h.b16 %v714
    %v891 = vunpack.c.l.b16 %v715
    %v892 = vunpack.c.h.b16 %v715
    %v893 = vunpack.c.l.b16 %v716
    %v894 = vunpack.c.h.b16 %v716
    %v895 = vunpack.c.l.b16 %v717
    %v896 = vunpack.c.h.b16 %v717
    %v897 = vunpack.c.l.b16 %v718
    %v898 = vunpack.c.h.b16 %v718
    %v899 = vunpack.c.l.b16 %v719
    %v900 = vunpack.c.h.b16 %v719
    %v901 = vunpack.c.l.b16 %v720
    %v902 = vunpack.c.h.b16 %v720
    %v903 = vunpack.c.l.b16 %v721
    %v904 = vunpack.c.h.b16 %v721
    %v905 = vunpack.c.l.b16 %v722
    %v906 = vunpack.c.h.b16 %v722
    %v907 = vunpack.c.l.b16 %v723
    %v908 = vunpack.c.h.b16 %v723
    %v909 = vunpack.c.l.b16 %v724
    %v910 = vunpack.c.h.b16 %v724
    %v911 = vunpack.c.l.b16 %v725
    %v912 = vunpack.c.h.b16 %v725
    %v913 = vunpack.c.l.b16 %v726
    %v914 = vunpack.c.h.b16 %v726
    %v915 = vunpack.c.l.b16 %v727
    %v916 = vunpack.c.h.b16 %v727
    %v917 = vunpack.c.l.b16 %v728
    %v918 = vunpack.c.h.b16 %v728
    %v919 = vunpack.c.l.b16 %v729
    %v920 = vunpack.c.h.b16 %v729
    %v921 = vunpack.c.l.b16 %v730
    %v922 = vunpack.c.h.b16 %v730
    %v923 = vunpack.c.l.b16 %v731
    %v924 = vunpack.c.h.b16 %v731
    %v925 = vunpack.c.l.b16 %v732
    %v926 = vunpack.c.h.b16 %v732
    %v927 = vunpack.c.l.b16 %v733
    %v928 = vunpack.c.h.b16 %v733
    %v929 = vunpack.c.l.b16 %v734
    %v930 = vunpack.c.h.b16 %v734
    %v931 = vunpack.c.l.b16 %v735
    %v932 = vunpack.c.h.b16 %v735
    %v933 = vunpack.c.l.b16 %v736
    %v934 = vunpack.c.h.b16 %v736
    %v935 = vunpack.c.l.b16 %v737
    %v936 = vunpack.c.h.b16 %v737
    %v937 = vunpack.c.l.b16 %v738
    %v938 = vunpack.c.h.b16 %v738
    %v939 = vunpack.c.l.b16 %v739
    %v940 = vunpack.c.h.b16 %v739
    %v941 = vunpack.c.l.b16 %v740
    %v942 = vunpack.c.h.b16 %v740
    %v943 = vunpack.c.l.b16 %v741
    %v944 = vunpack.c.h.b16 %v741
    %v945 = vunpack.c.l.b16 %v742
    %v946 = vunpack.c.h.b16 %v742
    %v947 = vunpack.c.l.b16 %v743
    %v948 = vunpack.c.h.b16 %v743
    %v949 = vunpack.c.l.b16 %v744
    %v950 = vunpack.c.h.b16 %v744
    %v951 = vunpack.c.l.b16 %v745
    %v952 = vunpack.c.h.b16 %v745
    %v953 = vunpack.c.l.b16 %v746
    %v954 = vunpack.c.h.b16 %v746
    %v955 = vunpack.c.l.b16 %v747
    %v956 = vunpack.c.h.b16 %v747
    %v957 = vunpack.c.l.b16 %v748
    %v958 = vunpack.c.h.b16 %v748
    %v959 = vunpack.c.l.b16 %v749
    %v960 = vunpack.c.h.b16 %v749
    %v961 = vunpack.c.l.b16 %v750
    %v962 = vunpack.c.h.b16 %v750
    %v963 = vunpack.c.l.b16 %v751
    %v964 = vunpack.c.h.b16 %v751
    %v965 = vunpack.c.l.b16 %v752
    %v966 = vunpack.c.h.b16 %v752
    %v967 = vunpack.c.l.b16 %v753
    %v968 = vunpack.c.h.b16 %v753
    %v969 = vunpack.c.l.b16 %v754
    %v970 = vunpack.c.h.b16 %v754
    %v971 = vunpack.c.l.b16 %v755
    %v972 = vunpack.c.h.b16 %v755
    %v973 = vunpack.c.l.b16 %v756
    %v974 = vunpack.c.h.b16 %v756
    %v975 = vunpack.c.l.b16 %v757
    %v976 = vunpack.c.h.b16 %v757
    %v977 = vunpack.c.l.b16 %v758
    %v978 = vunpack.c.h.b16 %v758
    %v979 = vunpack.c.l.b16 %v759
    %v980 = vunpack.c.h.b16 %v759
    %v981 = vunpack.c.l.b16 %v760
    %v982 = vunpack.c.h.b16 %v760
    %v983 = vpack.c.b16 %v859, %v855
    %v984 = vpack.c.b16 %v860, %v856
    %v985 = vpack.c.b16 %v861, %v857
    %v986 = vpack.c.b16 %v862, %v858
    %v987 = vpack.c.b16 %v867, %v863
    %v988 = vpack.c.b16 %v868, %v864
    %v989 = vpack.c.b16 %v869, %v865
    %v990 = vpack.c.b16 %v870, %v866
    %v991 = vpack.c.b16 %v875, %v871
    %v992 = vpack.c.b16 %v876, %v872
    %v993 = vpack.c.b16 %v877, %v873
    %v994 = vpack.c.b16 %v878, %v874
    %v995 = vpack.c.b16 %v883, %v879
    %v996 = vpack.c.b16 %v884, %v880
    %v997 = vpack.c.b16 %v885, %v881
    %v998 = vpack.c.b16 %v886, %v882
    %v999 = vpack.c.b16 %v891, %v887
    %v1000 = vpack.c.b16 %v892, %v888
    %v1001 = vpack.c.b16 %v893, %v889
    %v1002 = vpack.c.b16 %v894, %v890
    %v1003 = vpack.c.b16 %v899, %v895
    %v1004 = vpack.c.b16 %v900, %v896
    %v1005 = vpack.c.b16 %v901, %v897
    %v1006 = vpack.c.b16 %v902, %v898
    %v1007 = vpack.c.b16 %v907, %v903
    %v1008 = vpack.c.b16 %v908, %v904
    %v1009 = vpack.c.b16 %v909, %v905
    %v1010 = vpack.c.b16 %v910, %v906
    %v1011 = vpack.c.b16 %v915, %v911
    %v1012 = vpack.c.b16 %v916, %v912
    %v1013 = vpack.c.b16 %v917, %v913
    %v1014 = vpack.c.b16 %v918, %v914
    %v1015 = vpack.c.b16 %v923, %v919
    %v1016 = vpack.c.b16 %v924, %v920
    %v1017 = vpack.c.b16 %v925, %v921
    %v1018 = vpack.c.b16 %v926, %v922
    %v1019 = vpack.c.b16 %v931, %v927
    %v1020 = vpack.c.b16 %v932, %v928
    %v1021 = vpack.c.b16 %v933, %v929
    %v1022 = vpack.c.b16 %v934, %v930
    %v1023 = vpack.c.b16 %v939, %v935
    %v1024 = vpack.c.b16 %v940, %v936
    %v1025 = vpack.c.b16 %v941, %v937
    %v1026 = vpack.c.b16 %v942, %v938
    %v1027 = vpack.c.b16 %v947, %v943
    %v1028 = vpack.c.b16 %v948, %v944
    %v1029 = vpack.c.b16 %v949, %v945
    %v1030 = vpack.c.b16 %v950, %v946
    %v1031 = vpack.c.b16 %v955, %v951
    %v1032 = vpack.c.b16 %v956, %v952
    %v1033 = vpack.c.b16 %v957, %v953
    %v1034 = vpack.c.b16 %v958, %v954
    %v1035 = vpack.c.b16 %v963, %v959
    %v1036 = vpack.c.b16 %v964, %v960
    %v1037 = vpack.c.b16 %v965, %v961
    %v1038 = vpack.c.b16 %v966, %v962
    %v1039 = vpack.c.b16 %v971, %v967
    %v1040 = vpack.c.b16 %v972, %v968
    %v1041 = vpack.c.b16 %v973, %v969
    %v1042 = vpack.c.b16 %v974, %v970
    %v1043 = vpack.c.b16 %v979, %v975
    %v1044 = vpack.c.b16 %v980, %v976
    %v1045 = vpack.c.b16 %v981, %v977
    %v1046 = vpack.c.b16 %v982, %v978
    %1111 = vmatprep.subr.bf16.mxu0 %v1012
    %1112 = vmatpush1.bf16.msra.mxu0 %v1011
    %1113 = vmatprep.subr.bf16.mxu0 %v1008
    %1114 = vmatpush1.bf16.msra.mxu0 %v1007
    %1115 = vmatprep.subr.bf16.mxu0 %v1004
    %1116 = vmatpush1.bf16.msra.mxu0 %v1003
    %1117 = vmatprep.subr.bf16.mxu0 %v1000
    %1118 = vmatpush1.bf16.msra.mxu0 %v999
    %1119 = vmatprep.subr.bf16.mxu0 %v996
    %1120 = vmatpush1.bf16.msra.mxu0 %v995
    %1121 = vmatprep.subr.bf16.mxu0 %v992
    %1122 = vmatpush1.bf16.msra.mxu0 %v991
    %1123 = vmatprep.subr.bf16.mxu0 %v988
    %1124 = vmatpush1.bf16.msra.mxu0 %v987
    %1125 = vmatprep.subr.bf16.mxu0 %v984
    %1126 = vmatpush1.bf16.msra.mxu0 %v983
    %1127 = vmatprep.subr.bf16.mxu0 %v1044
    %1128 = vmatpush2.bf16.msra.mxu0 %v1043
    %1129 = vmatprep.subr.bf16.mxu0 %v1040
    %1130 = vmatpush2.bf16.msra.mxu0 %v1039
    %1131 = vmatprep.subr.bf16.mxu0 %v1036
    %1132 = vmatpush2.bf16.msra.mxu0 %v1035
    %1133 = vmatprep.subr.bf16.mxu0 %v1032
    %1134 = vmatpush2.bf16.msra.mxu0 %v1031
    %1135 = vmatprep.subr.bf16.mxu0 %v1028
    %1136 = vmatpush2.bf16.msra.mxu0 %v1027
    %1137 = vmatprep.subr.bf16.mxu0 %v1024
    %1138 = vmatpush2.bf16.msra.mxu0 %v1023
    %1139 = vmatprep.subr.bf16.mxu0 %v1020
    %1140 = vmatpush2.bf16.msra.mxu0 %v1019
    %1141 = vmatprep.subr.bf16.mxu0 %v1016
    %1142 = vmatpush2.bf16.msra.mxu0 %v1015
    %1143 = vmatprep.mubr.bf16.mxu0 %v788
    %1144 = vmatmul.mubr.bf16.gmra.mxu0 %v787
    %v1145 = vpop.f32.mrf.mxu0
    %v1146 = vadd.f32 %v767, %v1145
    %v1147 = vpop.f32.mrf.mxu0
    %v1148 = vadd.f32 %v771, %v1147
    %v1149 = vpop.f32.mrf.mxu0
    %v1150 = vpop.f32.mrf.mxu0
    %1151 = vdwg.mxu0
    %1152 = vmatprep.subr.bf16.mxu0 %v1014
    %1153 = vmatpush1.bf16.msra.mxu0 %v1013
    %1154 = vmatprep.subr.bf16.mxu0 %v1010
    %1155 = vmatpush1.bf16.msra.mxu0 %v1009
    %1156 = vmatprep.subr.bf16.mxu0 %v1006
    %1157 = vmatpush1.bf16.msra.mxu0 %v1005
    %1158 = vmatprep.subr.bf16.mxu0 %v1002
    %1159 = vmatpush1.bf16.msra.mxu0 %v1001
    %1160 = vmatprep.subr.bf16.mxu0 %v998
    %1161 = vmatpush1.bf16.msra.mxu0 %v997
    %1162 = vmatprep.subr.bf16.mxu0 %v994
    %1163 = vmatpush1.bf16.msra.mxu0 %v993
    %1164 = vmatprep.subr.bf16.mxu0 %v990
    %1165 = vmatpush1.bf16.msra.mxu0 %v989
    %1166 = vmatprep.subr.bf16.mxu0 %v986
    %1167 = vmatpush1.bf16.msra.mxu0 %v985
    %1168 = vmatprep.subr.bf16.mxu0 %v1046
    %1169 = vmatpush2.bf16.msra.mxu0 %v1045
    %1170 = vmatprep.subr.bf16.mxu0 %v1042
    %1171 = vmatpush2.bf16.msra.mxu0 %v1041
    %1172 = vmatprep.subr.bf16.mxu0 %v1038
    %1173 = vmatpush2.bf16.msra.mxu0 %v1037
    %1174 = vmatprep.subr.bf16.mxu0 %v1034
    %1175 = vmatpush2.bf16.msra.mxu0 %v1033
    %1176 = vmatprep.subr.bf16.mxu0 %v1030
    %1177 = vmatpush2.bf16.msra.mxu0 %v1029
    %1178 = vmatprep.subr.bf16.mxu0 %v1026
    %1179 = vmatpush2.bf16.msra.mxu0 %v1025
    %1180 = vmatprep.subr.bf16.mxu0 %v1022
    %1181 = vmatpush2.bf16.msra.mxu0 %v1021
    %1182 = vmatprep.subr.bf16.mxu0 %v1018
    %1183 = vmatpush2.bf16.msra.mxu0 %v1017
    %1184 = vmatprep.mubr.bf16.mxu0 %v788
    %1185 = vmatmul.mubr.bf16.gmra.mxu0 %v787
    %v1186 = vpop.f32.mrf.mxu0
    %v1187 = vadd.f32 %v775, %v1186
    %v1188 = vpop.f32.mrf.mxu0
    %v1189 = vadd.f32 %v779, %v1188
    %v1190 = vpop.f32.mrf.mxu0
    %v1191 = vpop.f32.mrf.mxu0
    %1192 = vdwg.mxu0
    %v1193 = vxor.u32 %v1146, 2147483648
    %v1194 = vmul.f32 %v1193, 1.442695
    %v1195 = vpow.pop %v1194
    %v1196 = vadd.f32 %v1195, 1.0
    %v1197 = vrcp.pop %v1196
    %v1198 = vmul.f32 1.0, %v1197
    %v1199 = vxor.u32 %v1148, 2147483648
    %v1200 = vmul.f32 %v1199, 1.442695
    %v1201 = vpow.pop %v1200
    %v1202 = vadd.f32 %v1201, 1.0
    %v1203 = vrcp.pop %v1202
    %v1204 = vmul.f32 1.0, %v1203
    %v1205 = vtanh.pop %v1187
    %v1206 = vxor.u32 %v1189, 2147483648
    %v1207 = vmul.f32 %v1206, 1.442695
    %v1208 = vpow.pop %v1207
    %v1209 = vadd.f32 %v1208, 1.0
    %v1210 = vrcp.pop %v1209
    %v1211 = vmul.f32 1.0, %v1210
    %v1212 = vmul.f32 %v1204, %v690
    %v1213 = vmul.f32 %v1198, %v1205
    %v1214 = vadd.f32 %v1212, %v1213
    %v1215 = vtanh.pop %v1214
    %v1216 = vmul.f32 %v1211, %v1215
    %s1217 = scalar_lea.vmem %s9, 8
    %1218 = vst [vmem:[%s1217] sm:$0xff] %v1216
    %s1219 = scalar_lea.vmem %s10, 8
    %1220 = vst [vmem:[%s1219] sm:$0xff] %v1214
    %v1221 = vpack.c.bf16 %v1216, %v1216
    %v1222 = vld [vmem:[#allocation10] sm:$0xf]
    %v1223 = vld [vmem:[#allocation10 + $0x4] sm:$0xf]
    %v1224 = vld [vmem:[#allocation10 + $0x8] sm:$0xf]
    %v1225 = vld [vmem:[#allocation10 + $0xc] sm:$0xf]
    %v1226 = vld [vmem:[#allocation10 + $0x10] sm:$0xf]
    %v1227 = vld [vmem:[#allocation10 + $0x14] sm:$0xf]
    %v1228 = vld [vmem:[#allocation10 + $0x18] sm:$0xf]
    %v1229 = vld [vmem:[#allocation10 + $0x1c] sm:$0xf]
    %v1230 = vld [vmem:[#allocation10 + $0x20] sm:$0xf]
    %v1231 = vld [vmem:[#allocation10 + $0x24] sm:$0xf]
    %v1232 = vld [vmem:[#allocation10 + $0x28] sm:$0xf]
    %v1233 = vld [vmem:[#allocation10 + $0x2c] sm:$0xf]
    %v1234 = vld [vmem:[#allocation10 + $0x30] sm:$0xf]
    %v1235 = vld [vmem:[#allocation10 + $0x34] sm:$0xf]
    %v1236 = vld [vmem:[#allocation10 + $0x38] sm:$0xf]
    %v1237 = vld [vmem:[#allocation10 + $0x3c] sm:$0xf]
    %v1238 = vld [vmem:[#allocation11] sm:$0x1]
    %v1240 = vlaneseq
    %v1241 = vshrl.u32 %v1240, 7
    %v1242 = vsub.s32 0, %v1241
    %v1243 = vrot.slane %v1238, %v1242
    %v1261 = vunpack.c.l.b16 %v1222
    %v1262 = vunpack.c.l.b16 %v1223
    %v1263 = vunpack.c.l.b16 %v1224
    %v1264 = vunpack.c.l.b16 %v1225
    %v1265 = vunpack.c.l.b16 %v1226
    %v1266 = vunpack.c.l.b16 %v1227
    %v1267 = vunpack.c.l.b16 %v1228
    %v1268 = vunpack.c.l.b16 %v1229
    %v1269 = vunpack.c.l.b16 %v1230
    %v1270 = vunpack.c.l.b16 %v1231
    %v1271 = vunpack.c.l.b16 %v1232
    %v1272 = vunpack.c.l.b16 %v1233
    %v1273 = vunpack.c.l.b16 %v1234
    %v1274 = vunpack.c.l.b16 %v1235
    %v1275 = vunpack.c.l.b16 %v1236
    %v1276 = vunpack.c.l.b16 %v1237
    %v1277 = vpack.c.b16 %v1262, %v1261
    %v1278 = vpack.c.b16 %v1264, %v1263
    %v1279 = vpack.c.b16 %v1266, %v1265
    %v1280 = vpack.c.b16 %v1268, %v1267
    %v1281 = vpack.c.b16 %v1270, %v1269
    %v1282 = vpack.c.b16 %v1272, %v1271
    %v1283 = vpack.c.b16 %v1274, %v1273
    %v1284 = vpack.c.b16 %v1276, %v1275
    %1293 = vmatprep.subr.bf16.mxu0 0
    %1294 = vmatpush1.bf16.msra.mxu0 %v1284
    %1295 = vmatprep.subr.bf16.mxu0 0
    %1296 = vmatpush1.bf16.msra.mxu0 %v1283
    %1297 = vmatprep.subr.bf16.mxu0 0
    %1298 = vmatpush1.bf16.msra.mxu0 %v1282
    %1299 = vmatprep.subr.bf16.mxu0 0
    %1300 = vmatpush1.bf16.msra.mxu0 %v1281
    %1301 = vmatprep.subr.bf16.mxu0 0
    %1302 = vmatpush1.bf16.msra.mxu0 %v1280
    %1303 = vmatprep.subr.bf16.mxu0 0
    %1304 = vmatpush1.bf16.msra.mxu0 %v1279
    %1305 = vmatprep.subr.bf16.mxu0 0
    %1306 = vmatpush1.bf16.msra.mxu0 %v1278
    %1307 = vmatprep.subr.bf16.mxu0 0
    %1308 = vmatpush1.bf16.msra.mxu0 %v1277
    %1309 = vmatprep.subr.bf16.mxu0 0
    %1310 = vmatpush2.bf16.msra.mxu0 0
    %1311 = vmatprep.subr.bf16.mxu0 0
    %1312 = vmatpush2.bf16.msra.mxu0 0
    %1313 = vmatprep.subr.bf16.mxu0 0
    %1314 = vmatpush2.bf16.msra.mxu0 0
    %1315 = vmatprep.subr.bf16.mxu0 0
    %1316 = vmatpush2.bf16.msra.mxu0 0
    %1317 = vmatprep.subr.bf16.mxu0 0
    %1318 = vmatpush2.bf16.msra.mxu0 0
    %1319 = vmatprep.subr.bf16.mxu0 0
    %1320 = vmatpush2.bf16.msra.mxu0 0
    %1321 = vmatprep.subr.bf16.mxu0 0
    %1322 = vmatpush2.bf16.msra.mxu0 0
    %1323 = vmatprep.subr.bf16.mxu0 0
    %1324 = vmatpush2.bf16.msra.mxu0 0
    %1325 = vmatprep.mubr.bf16.mxu0 0
    %1326 = vmatmul.mubr.bf16.gmra.mxu0 %v1221
    %v1327 = vpop.f32.mrf.mxu0
    %v1328 = vadd.f32 %v1243, %v1327
    %v1329 = vpop.f32.mrf.mxu0
    %v1330 = vpop.f32.mrf.mxu0
    %v1331 = vpop.f32.mrf.mxu0
    %1332 = vdwg.mxu0
    %1333 = vst [vmem:[#allocation13] sm:$0xff] %v1328
    // Predicated region
    $region54: #{decoder_forward.1} parent=1 // pred_check
      _
    $region55: #{decoder_forward.1} parent=1 // pred_check_branch
      %1335 = sbr.rel (0) target = $region57
    $region56: #{decoder_forward.1} parent=1 // pred_region
      %s1337 = ssub.s32 128, 128
      %1338 = vsyncadd [#allocation5], %s1337
      %s1340 = sshll.u32 [#allocation13], 4
      %s1341 = int_to_ptr.vmem [resolvable:$true] %s1340
      %1343 = dma.vmem_to_hbm [thread:$0]  %s1341, 128, %s8, [#allocation5]
    $region57: #{decoder_forward.1} parent=1 // pred_fallthru
      _
    // Predicated region
    $region58: #{decoder_forward.1} parent=1 // pred_check
      _
    $region59: #{decoder_forward.1} parent=1 // pred_check_branch
      %1345 = sbr.rel (0) target = $region61
    $region60: #{decoder_forward.1} parent=1 // pred_region
      _
    $region61: #{decoder_forward.1} parent=1 // pred_fallthru
      _
    // Predicated region
    $region62: #{decoder_forward.1} parent=1 // pred_check
      _
    $region63: #{decoder_forward.1} parent=1 // pred_check_branch
      %1347 = sbr.rel (0) target = $region65
    $region64: #{decoder_forward.1} parent=1 // pred_region
      _
    $region65: #{decoder_forward.1} parent=1 // pred_fallthru
      _
    // Predicated region
    $region66: #{decoder_forward.1} parent=1 // pred_check
      _
    $region67: #{decoder_forward.1} parent=1 // pred_check_branch
      %1349 = sbr.rel (0) target = $region69
    $region68: #{decoder_forward.1} parent=1 // pred_region
      %1350 = dma.done [#allocation5], 128
    $region69: #{decoder_forward.1} parent=1 // pred_fallthru
      _
    // Predicated region
    $region70: #{decoder_forward.1} parent=1 // pred_check
      _
    $region71: #{decoder_forward.1} parent=1 // pred_check_branch
      %1352 = sbr.rel (0) target = $region73
    $region72: #{decoder_forward.1} parent=1 // pred_region
      _
    $region73: #{decoder_forward.1} parent=1 // pred_fallthru
      _
    // Predicated region
    $region74: #{decoder_forward.1} parent=1 // pred_check
      _
    $region75: #{decoder_forward.1} parent=1 // pred_check_branch
      %1354 = sbr.rel (0) target = $region77
    $region76: #{decoder_forward.1} parent=1 // pred_region
      _
    $region77: #{decoder_forward.1} parent=1 // pred_fallthru
      _
    %1355 = vsyncpa [#allocation4], 1
    %1356 = vsyncpa [#allocation9], 1
    %1357 = vsyncpa [#allocation12], 1
    %1358 = vsyncpa [#allocation5], 1
    %1359 = vsyncpa [#allocation6], 1

</llo_original>
